<compile_context>
chip_gen: v7x
topology: tpu7x:2x2x1
jax: 0.10.0
libtpu: 0.0.40
codegen_flags: <defaults>
</compile_context>

<pallas_src>
import functools

import jax
import jax.numpy as jnp
from jax.experimental import pallas as pl
from jax.experimental.pallas import tpu as pltpu

N_ARCH = 3              # xception, res2net, efficientnet
MODELS_PER_ARCH = 3
N_MODELS = N_ARCH * MODELS_PER_ARCH   # 9
NM_PAD = 128            # lane-dense per-model logit/prob width
DEFAULT_TILE_D = 4096   # reduction tile (multiple of 128)


def _round_up(x, m):
    return ((x + m - 1) // m) * m


def _tiling(D, tile_d):
    """Pick the D (reduction) tile.  If D fits in one tile, use the full
    extent (no D padding of the activation at all)."""
    if D <= tile_d:
        return D, D, 1
    assert tile_d % 128 == 0, "tile_d must be lane-aligned"
    D_PAD = _round_up(D, tile_d)
    return tile_d, D_PAD, D_PAD // tile_d


# ----------------------------------------------------------------------------
# Kernel
# ----------------------------------------------------------------------------
def ensemble_kernel(x_ref, w1_ref, b1_ref, w2bd_ref, b2_ref, fold_ref,
                    out_ref, acc_ref):
    """Grid axis 0 iterates over D-tiles (reduction axis).

    x_ref    : (B_PAD, TD)   bf16  current D-slice of the flattened batch
    w1_ref   : (TD, NF)      bf16  current D-slice of the fused layer-1 (9F cols)
    b1_ref   : (1, NF)       f32   fused layer-1 bias
    w2bd_ref : (NF, 128)     bf16  block-diagonal layer-2 (constant block)
    b2_ref   : (1, 128)      f32   layer-2 bias (per model, zero padding)
    fold_ref : (1, 128)      f32   softmax(arch_weights)[arch(m)]/3, 0 in padding
    out_ref  : (B_PAD, 128)  f32   lane-dense output (pred broadcast)
    acc_ref  : (B_PAD, NF)   f32   VMEM accumulator for layer-1
    """
    k = pl.program_id(0)

    @pl.when(k == 0)
    def _init():
        acc_ref[...] = jnp.zeros_like(acc_ref)

    # Fused layer-1 partial matmul over this D-tile (bf16 in, f32 accumulate).
    acc_ref[...] += jnp.dot(x_ref[...], w1_ref[...],
                            preferred_element_type=jnp.float32)

    @pl.when(k == pl.num_programs(0) - 1)
    def _finalize():
        # Bias + ReLU (f32 epilogue).
        h = jnp.maximum(acc_ref[...] + b1_ref[...], 0.0)          # (B_PAD, NF)
        # Block-diagonal layer-2: per-model logits, all 9 models at once (MXU).
        logits = jnp.dot(h.astype(jnp.bfloat16), w2bd_ref[...],
                         preferred_element_type=jnp.float32) + b2_ref[...]
        # Exact sigmoid (runs once on a single small tile).
        probs = 1.0 / (1.0 + jnp.exp(-logits))                    # (B_PAD, 128)
        # Folded ensemble weights: softmax(aw)[arch]/3 per model, 0 in padding.
        pred = jnp.sum(probs * fold_ref[...], axis=-1, keepdims=True)
        # Lane-dense store; wrapper slices column 0.
        out_ref[...] = jnp.broadcast_to(pred, out_ref.shape)


# ----------------------------------------------------------------------------
# Parameters & one-time packing (hoisted out of the per-call forward)
# ----------------------------------------------------------------------------
def init_params(key, D, F):
    """Deterministic synthetic parameters for the 9 stand-in backbones."""
    k1, k2, k3, k4 = jax.random.split(key, 4)
    w1 = (jax.random.normal(k1, (N_MODELS, D, F), jnp.float32)
          * (1.0 / jnp.sqrt(jnp.float32(D))))
    b1 = jax.random.normal(k2, (N_MODELS, F), jnp.float32) * 0.01
    w2 = (jax.random.normal(k3, (N_MODELS, F), jnp.float32)
          * (1.0 / jnp.sqrt(jnp.float32(F))))
    b2 = jax.random.normal(k4, (N_MODELS, 1), jnp.float32) * 0.01
    # architecture_weights = nn.Parameter(torch.ones(3))
    aw = jnp.ones((N_ARCH,), jnp.float32)
    return w1, b1, w2, b2, aw


def pack_params(params, input_chw, *, tile_d=DEFAULT_TILE_D):
    """One-time weight packing (run once, NOT per forward call)."""
    w1, b1, w2, b2, aw = params
    C, H, W = input_chw
    D = C * H * W
    F = w1.shape[-1]
    NF = N_MODELS * F
    td, D_PAD, _ = _tiling(D, tile_d)

    # Fused layer-1: (9, D, F) -> (D, 9F); pad ONLY the reduction axis, keep
    # the 9F column axis at full (unpadded) extent in HBM; stream bf16.
    w1f = jnp.transpose(w1, (1, 0, 2)).reshape(D, NF)
    w1f = jnp.pad(w1f, ((0, D_PAD - D), (0, 0))).astype(jnp.bfloat16)
    b1f = b1.reshape(1, NF).astype(jnp.float32)

    # Block-diagonal layer-2: (9F, 128), bf16 (constant block, DMA'd once).
    bd = jnp.zeros((N_MODELS, F, N_MODELS), jnp.float32)
    bd = bd.at[jnp.arange(N_MODELS), :, jnp.arange(N_MODELS)].set(w2)
    w2bd = jnp.pad(bd.reshape(NF, N_MODELS),
                   ((0, 0), (0, NM_PAD - N_MODELS))).astype(jnp.bfloat16)
    b2r = jnp.pad(b2.reshape(1, N_MODELS),
                  ((0, 0), (0, NM_PAD - N_MODELS))).astype(jnp.float32)

    # Fold the ensemble glue into one per-model weight vector:
    # out = sum_a softmax(aw)_a * mean_m p == sum_m softmax(aw)_{arch(m)}/3 * p_m
    sm = jax.nn.softmax(aw)
    fold = jnp.repeat(sm, MODELS_PER_ARCH) / MODELS_PER_ARCH
    fold = jnp.pad(fold.reshape(1, N_MODELS),
                   ((0, 0), (0, NM_PAD - N_MODELS))).astype(jnp.float32)

    return dict(w1f=w1f, b1f=b1f, w2bd=w2bd, b2r=b2r, fold=fold)


# ----------------------------------------------------------------------------
# Forward (per-call): flatten/cast activation only, then the fused kernel
# ----------------------------------------------------------------------------
@functools.partial(jax.jit, static_argnames=("tile_d",))
def ensemble_forward(x_nchw, packed, *, tile_d=DEFAULT_TILE_D):
    w1f, b1f = packed["w1f"], packed["b1f"]
    w2bd, b2r, fold = packed["w2bd"], packed["b2r"], packed["fold"]

    B, C, H, W = x_nchw.shape
    D = C * H * W
    D_PAD_w, NF = w1f.shape
    td, D_PAD, n_k = _tiling(D, tile_d)
    assert D_PAD == D_PAD_w, "packed weights were built with a different tile_d"
    B_PAD = max(16, _round_up(B, 16))    # full bf16 sublane packing

    # Activation: flatten + row pad + bf16 cast (D is only padded when tiled).
    x = x_nchw.reshape(B, D)
    x = jnp.pad(x, ((0, B_PAD - B), (0, D_PAD - D))).astype(jnp.bfloat16)

    # Explicit scoped-VMEM budget: double-buffered tiles + accumulator + headroom.
    vmem_bytes = (
        2 * B_PAD * td * 2            # x D-slices (bf16, double-buffered)
        + 2 * td * NF * 2             # w1 D-slices (bf16, double-buffered)
        + 2 * NF * NM_PAD * 2         # block-diagonal layer-2 (bf16)
        + B_PAD * NF * 4              # f32 accumulator
        + 2 * B_PAD * NM_PAD * 4      # output tile
        + 2 * (NF + 2 * NM_PAD) * 4   # biases + fold
    )
    vmem_limit = int(min(vmem_bytes + (8 << 20), 48 << 20))

    out = pl.pallas_call(
        ensemble_kernel,
        out_shape=jax.ShapeDtypeStruct((B_PAD, NM_PAD), jnp.float32),
        grid=(n_k,),
        in_specs=[
            pl.BlockSpec((B_PAD, td), lambda k: (0, k)),     # x D-slice
            pl.BlockSpec((td, NF), lambda k: (k, 0)),        # w1 D-slice (unpadded cols)
            pl.BlockSpec((1, NF), lambda k: (0, 0)),         # b1
            pl.BlockSpec((NF, NM_PAD), lambda k: (0, 0)),    # w2 block-diag (bf16)
            pl.BlockSpec((1, NM_PAD), lambda k: (0, 0)),     # b2
            pl.BlockSpec((1, NM_PAD), lambda k: (0, 0)),     # folded ensemble weights
        ],
        out_specs=pl.BlockSpec((B_PAD, NM_PAD), lambda k: (0, 0)),
        scratch_shapes=[pltpu.VMEM((B_PAD, NF), jnp.float32)],
        compiler_params=pltpu.CompilerParams(
            dimension_semantics=("arbitrary",),   # reduction over D-tiles
            vmem_limit_bytes=vmem_limit,
        ),
    )(x, w1f, b1f, w2bd, b2r, fold)

    return out[:B, :1]


# ----------------------------------------------------------------------------
# Pure-JAX reference (same numeric path: bf16-quantized x/w1/h/w2, f32 math)
# ----------------------------------------------------------------------------
def ensemble_reference(x_nchw, params):
    w1, b1, w2, b2, aw = params
    B = x_nchw.shape[0]
    x = x_nchw.reshape(B, -1).astype(jnp.bfloat16).astype(jnp.float32)
    w1q = w1.astype(jnp.bfloat16).astype(jnp.float32)
    w2q = w2.astype(jnp.bfloat16).astype(jnp.float32)
    preds = []
    for m in range(N_MODELS):
        h = jnp.maximum(x @ w1q[m] + b1[m][None, :], 0.0)
        hq = h.astype(jnp.bfloat16).astype(jnp.float32)
        logit = jnp.sum(hq * w2q[m][None, :], axis=-1, keepdims=True) + b2[m][None, :]
        preds.append(1.0 / (1.0 + jnp.exp(-logit)))
    preds = jnp.stack(preds)                                   # (9, B, 1)
    arch = jnp.stack([preds[a * 3:(a + 1) * 3].mean(0) for a in range(N_ARCH)],
                     axis=1)                                   # (B, 3, 1)
    w = jax.nn.softmax(aw)
    return jnp.sum(arch * w.reshape(1, -1, 1), axis=1)         # (B, 1)


if __name__ == "__main__":
    key = jax.random.PRNGKey(0)
    kx, kp = jax.random.split(key)

    B, C, H, W = 2, 4, 16, 16      # small NCHW batch
    F = 32                         # hidden width of synthetic backbone head
    x = jax.random.normal(kx, (B, C, H, W), jnp.float32)
    params = init_params(kp, C * H * W, F)

    # One-time weight packing (hoisted out of the per-call forward).
    packed = pack_params(params, (C, H, W), tile_d=DEFAULT_TILE_D)
    packed = jax.tree_util.tree_map(jax.block_until_ready, packed)

    out = jax.block_until_ready(ensemble_forward(x, packed, tile_d=DEFAULT_TILE_D))
    ref = jax.block_until_ready(ensemble_reference(x, params))

    assert out.shape == (B, 1), out.shape
    assert jnp.allclose(out, ref, atol=2e-3, rtol=2e-3), (out, ref)

    print("KERNEL_OK")
</pallas_src>

<mosaic_0001>
module attributes {stable_mosaic.version = 11 : i64} {
  func.func @ensemble_kernel(%arg0: i32, %arg1: memref<16x1024xbf16, #tpu.memory_space<vmem>>, %arg2: memref<1024x288xbf16, #tpu.memory_space<vmem>>, %arg3: memref<1x288xf32, #tpu.memory_space<vmem>>, %arg4: memref<288x128xbf16, #tpu.memory_space<vmem>>, %arg5: memref<1x128xf32, #tpu.memory_space<vmem>>, %arg6: memref<1x128xf32, #tpu.memory_space<vmem>>, %arg7: memref<16x128xf32, #tpu.memory_space<vmem>>, %arg8: memref<16x288xf32, #tpu.memory_space<vmem>>) attributes {dimension_semantics = [#tpu.dimension_semantics<arbitrary>], iteration_bounds = array<i64: 1>, scalar_prefetch = 0 : i64, scratch_operands = 1 : i64, tpu.core_type = #tpu.core_type<tc>, window_params = [{transform_indices = @transform_0, window_bounds = array<i64: 16, 1024>}, {transform_indices = @transform_1, window_bounds = array<i64: 1024, 288>}, {pipeline_mode = #tpu.pipeline_mode<synchronous>, transform_indices = @transform_2, window_bounds = array<i64: 1, 288>}, {pipeline_mode = #tpu.pipeline_mode<synchronous>, transform_indices = @transform_3, window_bounds = array<i64: 288, 128>}, {pipeline_mode = #tpu.pipeline_mode<synchronous>, transform_indices = @transform_4, window_bounds = array<i64: 1, 128>}, {pipeline_mode = #tpu.pipeline_mode<synchronous>, transform_indices = @transform_5, window_bounds = array<i64: 1, 128>}, {pipeline_mode = #tpu.pipeline_mode<synchronous>, transform_indices = @transform_6, window_bounds = array<i64: 16, 128>}]} {
    %c0_i32 = arith.constant 0 : i32
    %0 = arith.cmpi eq, %arg0, %c0_i32 : i32
    %1 = arith.extui %0 : i1 to i32
    %c0_i32_0 = arith.constant 0 : i32
    %2 = arith.cmpi ne, %1, %c0_i32_0 : i32
    scf.if %2 {
      %cst_10 = arith.constant 0.000000e+00 : f32
      %12 = vector.broadcast %cst_10 : f32 to vector<16x288xf32>
      %c0_11 = arith.constant 0 : index
      %c0_12 = arith.constant 0 : index
      %13 = vector.load %arg8[%c0_11, %c0_12] : memref<16x288xf32, #tpu.memory_space<vmem>>, vector<16x288xf32>
      tpu.vector_store %arg8[%c0_11, %c0_12], %12 {strides = array<i32>} : memref<16x288xf32, #tpu.memory_space<vmem>>, vector<16x288xf32>,
    } else {
    }
    %c0 = arith.constant 0 : index
    %c0_1 = arith.constant 0 : index
    %3 = vector.load %arg8[%c0, %c0_1] : memref<16x288xf32, #tpu.memory_space<vmem>>, vector<16x288xf32>
    %c0_2 = arith.constant 0 : index
    %c0_3 = arith.constant 0 : index
    %4 = vector.load %arg1[%c0_2, %c0_3] : memref<16x1024xbf16, #tpu.memory_space<vmem>>, vector<16x1024xbf16>
    %c0_4 = arith.constant 0 : index
    %c0_5 = arith.constant 0 : index
    %5 = vector.load %arg2[%c0_4, %c0_5] : memref<1024x288xbf16, #tpu.memory_space<vmem>>, vector<1024x288xbf16>
    %cst = arith.constant dense<0.000000e+00> : vector<16x288xf32>
    %6 = tpu.matmul %4, %5, %cst {dimension_numbers = #tpu.dot_dimension_numbers<[1], [0], [0], [1], [0, 0, 1, 1], [], []>} : vector<16x1024xbf16>, vector<1024x288xbf16>, vector<16x288xf32> -> vector<16x288xf32>
    %7 = arith.addf %3, %6 : vector<16x288xf32>
    %c0_6 = arith.constant 0 : index
    %c0_7 = arith.constant 0 : index
    %8 = vector.load %arg8[%c0_6, %c0_7] : memref<16x288xf32, #tpu.memory_space<vmem>>, vector<16x288xf32>
    tpu.vector_store %arg8[%c0_6, %c0_7], %7 {strides = array<i32>} : memref<16x288xf32, #tpu.memory_space<vmem>>, vector<16x288xf32>,
    %c0_i32_8 = arith.constant 0 : i32
    %9 = arith.cmpi eq, %arg0, %c0_i32_8 : i32
    %10 = arith.extui %9 : i1 to i32
    %c0_i32_9 = arith.constant 0 : i32
    %11 = arith.cmpi ne, %10, %c0_i32_9 : i32
    scf.if %11 {
      %c0_10 = arith.constant 0 : index
      %c0_11 = arith.constant 0 : index
      %12 = vector.load %arg8[%c0_10, %c0_11] : memref<16x288xf32, #tpu.memory_space<vmem>>, vector<16x288xf32>
      %c0_12 = arith.constant 0 : index
      %c0_13 = arith.constant 0 : index
      %13 = vector.load %arg3[%c0_12, %c0_13] : memref<1x288xf32, #tpu.memory_space<vmem>>, vector<1x288xf32>
      %14 = vector.broadcast %13 : vector<1x288xf32> to vector<16x288xf32>
      %15 = arith.addf %12, %14 : vector<16x288xf32>
      %cst_14 = arith.constant 0.000000e+00 : f32
      %16 = vector.broadcast %cst_14 : f32 to vector<16x288xf32>
      %17 = arith.maximumf %15, %16 : vector<16x288xf32>
      %18 = arith.truncf %17 : vector<16x288xf32> to vector<16x288xbf16>
      %c0_15 = arith.constant 0 : index
      %c0_16 = arith.constant 0 : index
      %19 = vector.load %arg4[%c0_15, %c0_16] : memref<288x128xbf16, #tpu.memory_space<vmem>>, vector<288x128xbf16>
      %cst_17 = arith.constant dense<0.000000e+00> : vector<16x128xf32>
      %20 = tpu.matmul %18, %19, %cst_17 {dimension_numbers = #tpu.dot_dimension_numbers<[1], [0], [0], [1], [0, 0, 1, 1], [], []>} : vector<16x288xbf16>, vector<288x128xbf16>, vector<16x128xf32> -> vector<16x128xf32>
      %c0_18 = arith.constant 0 : index
      %c0_19 = arith.constant 0 : index
      %21 = vector.load %arg5[%c0_18, %c0_19] : memref<1x128xf32, #tpu.memory_space<vmem>>, vector<1x128xf32>
      %22 = vector.broadcast %21 : vector<1x128xf32> to vector<16x128xf32>
      %23 = arith.addf %20, %22 : vector<16x128xf32>
      %cst_20 = arith.constant 0.000000e+00 : f32
      %24 = vector.broadcast %cst_20 : f32 to vector<16x128xf32>
      %25 = arith.subf %24, %23 : vector<16x128xf32>
      %26 = math.exp %25 : vector<16x128xf32>
      %cst_21 = arith.constant 1.000000e+00 : f32
      %27 = vector.broadcast %cst_21 : f32 to vector<16x128xf32>
      %28 = arith.addf %27, %26 : vector<16x128xf32>
      %cst_22 = arith.constant 1.000000e+00 : f32
      %29 = vector.broadcast %cst_22 : f32 to vector<16x128xf32>
      %30 = arith.divf %29, %28 : vector<16x128xf32>
      %c0_23 = arith.constant 0 : index
      %c0_24 = arith.constant 0 : index
      %31 = vector.load %arg6[%c0_23, %c0_24] : memref<1x128xf32, #tpu.memory_space<vmem>>, vector<1x128xf32>
      %32 = vector.broadcast %31 : vector<1x128xf32> to vector<16x128xf32>
      %33 = arith.mulf %30, %32 : vector<16x128xf32>
      %cst_25 = arith.constant dense<0.000000e+00> : vector<16xf32>
      %34 = vector.multi_reduction <add>, %33, %cst_25 [1] : vector<16x128xf32> to vector<16xf32>
      %35 = vector.shape_cast %34 : vector<16xf32> to vector<16x1xf32>
      %36 = vector.shape_cast %35 : vector<16x1xf32> to vector<16x1xf32>
      %37 = vector.broadcast %36 : vector<16x1xf32> to vector<16x128xf32>
      %c0_26 = arith.constant 0 : index
      %c0_27 = arith.constant 0 : index
      %38 = vector.load %arg7[%c0_26, %c0_27] : memref<16x128xf32, #tpu.memory_space<vmem>>, vector<16x128xf32>
      tpu.vector_store %arg7[%c0_26, %c0_27], %37 {strides = array<i32>} : memref<16x128xf32, #tpu.memory_space<vmem>>, vector<16x128xf32>,
    } else {
    }
    return
  }
  func.func @transform_0(%arg0: i32) -> (i32, i32) {
    %c0_i32 = arith.constant 0 : i32
    %c0_i32_0 = arith.constant 0 : i32
    return %c0_i32, %arg0 : i32, i32
  }
  func.func @transform_1(%arg0: i32) -> (i32, i32) {
    %c0_i32 = arith.constant 0 : i32
    %c0_i32_0 = arith.constant 0 : i32
    return %arg0, %c0_i32 : i32, i32
  }
  func.func @transform_2(%arg0: i32) -> (i32, i32) {
    %c0_i32 = arith.constant 0 : i32
    %c0_i32_0 = arith.constant 0 : i32
    %c0_i32_1 = arith.constant 0 : i32
    return %c0_i32, %c0_i32_0 : i32, i32
  }
  func.func @transform_3(%arg0: i32) -> (i32, i32) {
    %c0_i32 = arith.constant 0 : i32
    %c0_i32_0 = arith.constant 0 : i32
    %c0_i32_1 = arith.constant 0 : i32
    return %c0_i32, %c0_i32_0 : i32, i32
  }
  func.func @transform_4(%arg0: i32) -> (i32, i32) {
    %c0_i32 = arith.constant 0 : i32
    %c0_i32_0 = arith.constant 0 : i32
    %c0_i32_1 = arith.constant 0 : i32
    return %c0_i32, %c0_i32_0 : i32, i32
  }
  func.func @transform_5(%arg0: i32) -> (i32, i32) {
    %c0_i32 = arith.constant 0 : i32
    %c0_i32_0 = arith.constant 0 : i32
    %c0_i32_1 = arith.constant 0 : i32
    return %c0_i32, %c0_i32_0 : i32, i32
  }
  func.func @transform_6(%arg0: i32) -> (i32, i32) {
    %c0_i32 = arith.constant 0 : i32
    %c0_i32_0 = arith.constant 0 : i32
    %c0_i32_1 = arith.constant 0 : i32
    return %c0_i32, %c0_i32_0 : i32, i32
  }
}

</mosaic_0001>

<llo_original>
// kernel: ensemble_forward.1
$region0: #{ensemble_forward.1}
  #allocation0 [shape = 'u32[]', space=smem, size = 0x4, offset = 0x4, fixed_abs, tag = 'smem constant byte address 0x4 - core index']
  #allocation1 [shape = 'u32[144,128]{1,0:T(1,128)}', space=vmem, size = 0x12000, scoped, tag = 'internal scratch']
  #allocation2 [shape = 'f32[16,288]{1,0:T(8,128)}', space=vmem, size = 0x6000, scoped, tag = 'scratch operand']
  %s0 = inlined_call_operand.vmem [shape: bf16[16,1024], index: 0, kind: input, shape index: {}]
  %s1 = inlined_call_operand.vmem [shape: bf16[1024,288], index: 1, kind: input, shape index: {}]
  %s2 = inlined_call_operand.vmem [shape: f32[1,288], index: 2, kind: input, shape index: {}]
  %s3 = inlined_call_operand.vmem [shape: bf16[288,128], index: 3, kind: input, shape index: {}]
  %s4 = inlined_call_operand.vmem [shape: f32[1,128], index: 4, kind: input, shape index: {}]
  %s5 = inlined_call_operand.vmem [shape: f32[1,128], index: 5, kind: input, shape index: {}]
  %s6 = inlined_call_operand.vmem [shape: f32[16,128], index: 6, kind: output, shape index: {}]
  %s7 = sld [smem:[#allocation0]]
  $region42: #{ensemble_forward.1} parent=0
    _
  %s9 = ssub.s32 1, %s7
  %s10 = scalar_select 0, %s9, %s7
  // Predicated region
  $region2: #{ensemble_forward.1} parent=0 // pred_check
    _
  $region3: #{ensemble_forward.1} parent=0 // pred_check_branch
    %12 = sbr.rel (0) target = $region5
  $region4: #{ensemble_forward.1} parent=0 // pred_region
    _
  $region5: #{ensemble_forward.1} parent=0 // pred_fallthru
    _
  // Predicated region
  $region6: #{ensemble_forward.1} parent=0 // pred_check
    _
  $region7: #{ensemble_forward.1} parent=0 // pred_check_branch
    %14 = sbr.rel (0) target = $region9
  $region8: #{ensemble_forward.1} parent=0 // pred_region
    _
  $region9: #{ensemble_forward.1} parent=0 // pred_fallthru
    _
  // Predicated region
  $region10: #{ensemble_forward.1} parent=0 // pred_check
    _
  $region11: #{ensemble_forward.1} parent=0 // pred_check_branch
    %16 = sbr.rel (0) target = $region13
  $region12: #{ensemble_forward.1} parent=0 // pred_region
    _
  $region13: #{ensemble_forward.1} parent=0 // pred_fallthru
    _
  // Predicated region
  $region14: #{ensemble_forward.1} parent=0 // pred_check
    _
  $region15: #{ensemble_forward.1} parent=0 // pred_check_branch
    %18 = sbr.rel (0) target = $region17
  $region16: #{ensemble_forward.1} parent=0 // pred_region
    _
  $region17: #{ensemble_forward.1} parent=0 // pred_fallthru
    _
  // Predicated region
  $region18: #{ensemble_forward.1} parent=0 // pred_check
    _
  $region19: #{ensemble_forward.1} parent=0 // pred_check_branch
    %20 = sbr.rel (0) target = $region21
  $region20: #{ensemble_forward.1} parent=0 // pred_region
    _
  $region21: #{ensemble_forward.1} parent=0 // pred_fallthru
    _
  // Predicated region
  $region22: #{ensemble_forward.1} parent=0 // pred_check
    _
  $region23: #{ensemble_forward.1} parent=0 // pred_check_branch
    %22 = sbr.rel (0) target = $region25
  $region24: #{ensemble_forward.1} parent=0 // pred_region
    _
  $region25: #{ensemble_forward.1} parent=0 // pred_fallthru
    _
  %p24 = scmp.eq.s32.totalorder 0, 0
  // Predicated region
  $region26: #{ensemble_forward.1} parent=0 // pred_check
    %p25 = pneg %p24
  $region27: #{ensemble_forward.1} parent=0 // pred_check_branch
    %27 = sbr.rel (%p25) target = $region29
  $region28: #{ensemble_forward.1} parent=0 // pred_region
    %28 = vst [vmem:[#allocation2] sm:$0xff] 0.0
    %29 = vst [vmem:[#allocation2 + $0x8] sm:$0xff] 0.0
    %vm30 = vcmask 261120
    %31 = vst.msk [vmem:[#allocation2 + $0x10] sm:$0xff] %vm30, 0.0
    %32 = vst [vmem:[#allocation2 + $0x18] sm:$0xff] 0.0
    %33 = vst [vmem:[#allocation2 + $0x20] sm:$0xff] 0.0
    %34 = vst.msk [vmem:[#allocation2 + $0x28] sm:$0xff] %vm30, 0.0
  $region29: #{ensemble_forward.1} parent=0 // pred_fallthru
    _
  %v35 = vld [vmem:[#allocation2] sm:$0xff]
  %v36 = vld [vmem:[#allocation2 + $0x8] sm:$0xff]
  %v37 = vld [vmem:[#allocation2 + $0x10] sm:$0xff]
  %v38 = vld [vmem:[#allocation2 + $0x18] sm:$0xff]
  %v39 = vld [vmem:[#allocation2 + $0x20] sm:$0xff]
  %v40 = vld [vmem:[#allocation2 + $0x28] sm:$0xff]
  %v41 = vld [vmem:[%s0] sm:$0xff]
  %v42 = vld [vmem:[%s0 + $0x8] sm:$0xff]
  %v43 = vld [vmem:[%s0 + $0x10] sm:$0xff]
  %v44 = vld [vmem:[%s0 + $0x18] sm:$0xff]
  %v45 = vld [vmem:[%s0 + $0x20] sm:$0xff]
  %v46 = vld [vmem:[%s0 + $0x28] sm:$0xff]
  %v47 = vld [vmem:[%s0 + $0x30] sm:$0xff]
  %v48 = vld [vmem:[%s0 + $0x38] sm:$0xff]
  %v49 = vld [vmem:[%s1] sm:$0xff]
  %v50 = vld [vmem:[%s1 + $0x8] sm:$0xf]
  %v51 = vld [vmem:[%s1 + $0xc] sm:$0xff]
  %v52 = vld [vmem:[%s1 + $0x14] sm:$0xf]
  %v53 = vld [vmem:[%s1 + $0x18] sm:$0xff]
  %v54 = vld [vmem:[%s1 + $0x20] sm:$0xf]
  %v55 = vld [vmem:[%s1 + $0x24] sm:$0xff]
  %v56 = vld [vmem:[%s1 + $0x2c] sm:$0xf]
  %v57 = vld [vmem:[%s1 + $0x30] sm:$0xff]
  %v58 = vld [vmem:[%s1 + $0x38] sm:$0xf]
  %v59 = vld [vmem:[%s1 + $0x3c] sm:$0xff]
  %v60 = vld [vmem:[%s1 + $0x44] sm:$0xf]
  %v61 = vld [vmem:[%s1 + $0x48] sm:$0xff]
  %v62 = vld [vmem:[%s1 + $0x50] sm:$0xf]
  %v63 = vld [vmem:[%s1 + $0x54] sm:$0xff]
  %v64 = vld [vmem:[%s1 + $0x5c] sm:$0xf]
  %v65 = vld [vmem:[%s1 + $0x60] sm:$0xff]
  %v66 = vld [vmem:[%s1 + $0x68] sm:$0xf]
  %v67 = vld [vmem:[%s1 + $0x6c] sm:$0xff]
  %v68 = vld [vmem:[%s1 + $0x74] sm:$0xf]
  %v69 = vld [vmem:[%s1 + $0x78] sm:$0xff]
  %v70 = vld [vmem:[%s1 + $0x80] sm:$0xf]
  %v71 = vld [vmem:[%s1 + $0x84] sm:$0xff]
  %v72 = vld [vmem:[%s1 + $0x8c] sm:$0xf]
  %v73 = vld [vmem:[%s1 + $0x90] sm:$0xff]
  %v74 = vld [vmem:[%s1 + $0x98] sm:$0xf]
  %v75 = vld [vmem:[%s1 + $0x9c] sm:$0xff]
  %v76 = vld [vmem:[%s1 + $0xa4] sm:$0xf]
  %v77 = vld [vmem:[%s1 + $0xa8] sm:$0xff]
  %v78 = vld [vmem:[%s1 + $0xb0] sm:$0xf]
  %v79 = vld [vmem:[%s1 + $0xb4] sm:$0xff]
  %v80 = vld [vmem:[%s1 + $0xbc] sm:$0xf]
  %v81 = vld [vmem:[%s1 + $0xc0] sm:$0xff]
  %v82 = vld [vmem:[%s1 + $0xc8] sm:$0xf]
  %v83 = vld [vmem:[%s1 + $0xcc] sm:$0xff]
  %v84 = vld [vmem:[%s1 + $0xd4] sm:$0xf]
  %v85 = vld [vmem:[%s1 + $0xd8] sm:$0xff]
  %v86 = vld [vmem:[%s1 + $0xe0] sm:$0xf]
  %v87 = vld [vmem:[%s1 + $0xe4] sm:$0xff]
  %v88 = vld [vmem:[%s1 + $0xec] sm:$0xf]
  %v89 = vld [vmem:[%s1 + $0xf0] sm:$0xff]
  %v90 = vld [vmem:[%s1 + $0xf8] sm:$0xf]
  %v91 = vld [vmem:[%s1 + $0xfc] sm:$0xff]
  %v92 = vld [vmem:[%s1 + $0x104] sm:$0xf]
  %v93 = vld [vmem:[%s1 + $0x108] sm:$0xff]
  %v94 = vld [vmem:[%s1 + $0x110] sm:$0xf]
  %v95 = vld [vmem:[%s1 + $0x114] sm:$0xff]
  %v96 = vld [vmem:[%s1 + $0x11c] sm:$0xf]
  %v97 = vld [vmem:[%s1 + $0x120] sm:$0xff]
  %v98 = vld [vmem:[%s1 + $0x128] sm:$0xf]
  %v99 = vld [vmem:[%s1 + $0x12c] sm:$0xff]
  %v100 = vld [vmem:[%s1 + $0x134] sm:$0xf]
  %v101 = vld [vmem:[%s1 + $0x138] sm:$0xff]
  %v102 = vld [vmem:[%s1 + $0x140] sm:$0xf]
  %v103 = vld [vmem:[%s1 + $0x144] sm:$0xff]
  %v104 = vld [vmem:[%s1 + $0x14c] sm:$0xf]
  %v105 = vld [vmem:[%s1 + $0x150] sm:$0xff]
  %v106 = vld [vmem:[%s1 + $0x158] sm:$0xf]
  %v107 = vld [vmem:[%s1 + $0x15c] sm:$0xff]
  %v108 = vld [vmem:[%s1 + $0x164] sm:$0xf]
  %v109 = vld [vmem:[%s1 + $0x168] sm:$0xff]
  %v110 = vld [vmem:[%s1 + $0x170] sm:$0xf]
  %v111 = vld [vmem:[%s1 + $0x174] sm:$0xff]
  %v112 = vld [vmem:[%s1 + $0x17c] sm:$0xf]
  %v113 = vld [vmem:[%s1 + $0x180] sm:$0xff]
  %v114 = vld [vmem:[%s1 + $0x188] sm:$0xf]
  %v115 = vld [vmem:[%s1 + $0x18c] sm:$0xff]
  %v116 = vld [vmem:[%s1 + $0x194] sm:$0xf]
  %v117 = vld [vmem:[%s1 + $0x198] sm:$0xff]
  %v118 = vld [vmem:[%s1 + $0x1a0] sm:$0xf]
  %v119 = vld [vmem:[%s1 + $0x1a4] sm:$0xff]
  %v120 = vld [vmem:[%s1 + $0x1ac] sm:$0xf]
  %v121 = vld [vmem:[%s1 + $0x1b0] sm:$0xff]
  %v122 = vld [vmem:[%s1 + $0x1b8] sm:$0xf]
  %v123 = vld [vmem:[%s1 + $0x1bc] sm:$0xff]
  %v124 = vld [vmem:[%s1 + $0x1c4] sm:$0xf]
  %v125 = vld [vmem:[%s1 + $0x1c8] sm:$0xff]
  %v126 = vld [vmem:[%s1 + $0x1d0] sm:$0xf]
  %v127 = vld [vmem:[%s1 + $0x1d4] sm:$0xff]
  %v128 = vld [vmem:[%s1 + $0x1dc] sm:$0xf]
  %v129 = vld [vmem:[%s1 + $0x1e0] sm:$0xff]
  %v130 = vld [vmem:[%s1 + $0x1e8] sm:$0xf]
  %v131 = vld [vmem:[%s1 + $0x1ec] sm:$0xff]
  %v132 = vld [vmem:[%s1 + $0x1f4] sm:$0xf]
  %v133 = vld [vmem:[%s1 + $0x1f8] sm:$0xff]
  %v134 = vld [vmem:[%s1 + $0x200] sm:$0xf]
  %v135 = vld [vmem:[%s1 + $0x204] sm:$0xff]
  %v136 = vld [vmem:[%s1 + $0x20c] sm:$0xf]
  %v137 = vld [vmem:[%s1 + $0x210] sm:$0xff]
  %v138 = vld [vmem:[%s1 + $0x218] sm:$0xf]
  %v139 = vld [vmem:[%s1 + $0x21c] sm:$0xff]
  %v140 = vld [vmem:[%s1 + $0x224] sm:$0xf]
  %v141 = vld [vmem:[%s1 + $0x228] sm:$0xff]
  %v142 = vld [vmem:[%s1 + $0x230] sm:$0xf]
  %v143 = vld [vmem:[%s1 + $0x234] sm:$0xff]
  %v144 = vld [vmem:[%s1 + $0x23c] sm:$0xf]
  %v145 = vld [vmem:[%s1 + $0x240] sm:$0xff]
  %v146 = vld [vmem:[%s1 + $0x248] sm:$0xf]
  %v147 = vld [vmem:[%s1 + $0x24c] sm:$0xff]
  %v148 = vld [vmem:[%s1 + $0x254] sm:$0xf]
  %v149 = vld [vmem:[%s1 + $0x258] sm:$0xff]
  %v150 = vld [vmem:[%s1 + $0x260] sm:$0xf]
  %v151 = vld [vmem:[%s1 + $0x264] sm:$0xff]
  %v152 = vld [vmem:[%s1 + $0x26c] sm:$0xf]
  %v153 = vld [vmem:[%s1 + $0x270] sm:$0xff]
  %v154 = vld [vmem:[%s1 + $0x278] sm:$0xf]
  %v155 = vld [vmem:[%s1 + $0x27c] sm:$0xff]
  %v156 = vld [vmem:[%s1 + $0x284] sm:$0xf]
  %v157 = vld [vmem:[%s1 + $0x288] sm:$0xff]
  %v158 = vld [vmem:[%s1 + $0x290] sm:$0xf]
  %v159 = vld [vmem:[%s1 + $0x294] sm:$0xff]
  %v160 = vld [vmem:[%s1 + $0x29c] sm:$0xf]
  %v161 = vld [vmem:[%s1 + $0x2a0] sm:$0xff]
  %v162 = vld [vmem:[%s1 + $0x2a8] sm:$0xf]
  %v163 = vld [vmem:[%s1 + $0x2ac] sm:$0xff]
  %v164 = vld [vmem:[%s1 + $0x2b4] sm:$0xf]
  %v165 = vld [vmem:[%s1 + $0x2b8] sm:$0xff]
  %v166 = vld [vmem:[%s1 + $0x2c0] sm:$0xf]
  %v167 = vld [vmem:[%s1 + $0x2c4] sm:$0xff]
  %v168 = vld [vmem:[%s1 + $0x2cc] sm:$0xf]
  %v169 = vld [vmem:[%s1 + $0x2d0] sm:$0xff]
  %v170 = vld [vmem:[%s1 + $0x2d8] sm:$0xf]
  %v171 = vld [vmem:[%s1 + $0x2dc] sm:$0xff]
  %v172 = vld [vmem:[%s1 + $0x2e4] sm:$0xf]
  %v173 = vld [vmem:[%s1 + $0x2e8] sm:$0xff]
  %v174 = vld [vmem:[%s1 + $0x2f0] sm:$0xf]
  %v175 = vld [vmem:[%s1 + $0x2f4] sm:$0xff]
  %v176 = vld [vmem:[%s1 + $0x2fc] sm:$0xf]
  %v177 = vld [vmem:[%s1 + $0x300] sm:$0xff]
  %v178 = vld [vmem:[%s1 + $0x308] sm:$0xf]
  %v179 = vld [vmem:[%s1 + $0x30c] sm:$0xff]
  %v180 = vld [vmem:[%s1 + $0x314] sm:$0xf]
  %v181 = vld [vmem:[%s1 + $0x318] sm:$0xff]
  %v182 = vld [vmem:[%s1 + $0x320] sm:$0xf]
  %v183 = vld [vmem:[%s1 + $0x324] sm:$0xff]
  %v184 = vld [vmem:[%s1 + $0x32c] sm:$0xf]
  %v185 = vld [vmem:[%s1 + $0x330] sm:$0xff]
  %v186 = vld [vmem:[%s1 + $0x338] sm:$0xf]
  %v187 = vld [vmem:[%s1 + $0x33c] sm:$0xff]
  %v188 = vld [vmem:[%s1 + $0x344] sm:$0xf]
  %v189 = vld [vmem:[%s1 + $0x348] sm:$0xff]
  %v190 = vld [vmem:[%s1 + $0x350] sm:$0xf]
  %v191 = vld [vmem:[%s1 + $0x354] sm:$0xff]
  %v192 = vld [vmem:[%s1 + $0x35c] sm:$0xf]
  %v193 = vld [vmem:[%s1 + $0x360] sm:$0xff]
  %v194 = vld [vmem:[%s1 + $0x368] sm:$0xf]
  %v195 = vld [vmem:[%s1 + $0x36c] sm:$0xff]
  %v196 = vld [vmem:[%s1 + $0x374] sm:$0xf]
  %v197 = vld [vmem:[%s1 + $0x378] sm:$0xff]
  %v198 = vld [vmem:[%s1 + $0x380] sm:$0xf]
  %v199 = vld [vmem:[%s1 + $0x384] sm:$0xff]
  %v200 = vld [vmem:[%s1 + $0x38c] sm:$0xf]
  %v201 = vld [vmem:[%s1 + $0x390] sm:$0xff]
  %v202 = vld [vmem:[%s1 + $0x398] sm:$0xf]
  %v203 = vld [vmem:[%s1 + $0x39c] sm:$0xff]
  %v204 = vld [vmem:[%s1 + $0x3a4] sm:$0xf]
  %v205 = vld [vmem:[%s1 + $0x3a8] sm:$0xff]
  %v206 = vld [vmem:[%s1 + $0x3b0] sm:$0xf]
  %v207 = vld [vmem:[%s1 + $0x3b4] sm:$0xff]
  %v208 = vld [vmem:[%s1 + $0x3bc] sm:$0xf]
  %v209 = vld [vmem:[%s1 + $0x3c0] sm:$0xff]
  %v210 = vld [vmem:[%s1 + $0x3c8] sm:$0xf]
  %v211 = vld [vmem:[%s1 + $0x3cc] sm:$0xff]
  %v212 = vld [vmem:[%s1 + $0x3d4] sm:$0xf]
  %v213 = vld [vmem:[%s1 + $0x3d8] sm:$0xff]
  %v214 = vld [vmem:[%s1 + $0x3e0] sm:$0xf]
  %v215 = vld [vmem:[%s1 + $0x3e4] sm:$0xff]
  %v216 = vld [vmem:[%s1 + $0x3ec] sm:$0xf]
  %v217 = vld [vmem:[%s1 + $0x3f0] sm:$0xff]
  %v218 = vld [vmem:[%s1 + $0x3f8] sm:$0xf]
  %v219 = vld [vmem:[%s1 + $0x3fc] sm:$0xff]
  %v220 = vld [vmem:[%s1 + $0x404] sm:$0xf]
  %v221 = vld [vmem:[%s1 + $0x408] sm:$0xff]
  %v222 = vld [vmem:[%s1 + $0x410] sm:$0xf]
  %v223 = vld [vmem:[%s1 + $0x414] sm:$0xff]
  %v224 = vld [vmem:[%s1 + $0x41c] sm:$0xf]
  %v225 = vld [vmem:[%s1 + $0x420] sm:$0xff]
  %v226 = vld [vmem:[%s1 + $0x428] sm:$0xf]
  %v227 = vld [vmem:[%s1 + $0x42c] sm:$0xff]
  %v228 = vld [vmem:[%s1 + $0x434] sm:$0xf]
  %v229 = vld [vmem:[%s1 + $0x438] sm:$0xff]
  %v230 = vld [vmem:[%s1 + $0x440] sm:$0xf]
  %v231 = vld [vmem:[%s1 + $0x444] sm:$0xff]
  %v232 = vld [vmem:[%s1 + $0x44c] sm:$0xf]
  %v233 = vld [vmem:[%s1 + $0x450] sm:$0xff]
  %v234 = vld [vmem:[%s1 + $0x458] sm:$0xf]
  %v235 = vld [vmem:[%s1 + $0x45c] sm:$0xff]
  %v236 = vld [vmem:[%s1 + $0x464] sm:$0xf]
  %v237 = vld [vmem:[%s1 + $0x468] sm:$0xff]
  %v238 = vld [vmem:[%s1 + $0x470] sm:$0xf]
  %v239 = vld [vmem:[%s1 + $0x474] sm:$0xff]
  %v240 = vld [vmem:[%s1 + $0x47c] sm:$0xf]
  %v241 = vld [vmem:[%s1 + $0x480] sm:$0xff]
  %v242 = vld [vmem:[%s1 + $0x488] sm:$0xf]
  %v243 = vld [vmem:[%s1 + $0x48c] sm:$0xff]
  %v244 = vld [vmem:[%s1 + $0x494] sm:$0xf]
  %v245 = vld [vmem:[%s1 + $0x498] sm:$0xff]
  %v246 = vld [vmem:[%s1 + $0x4a0] sm:$0xf]
  %v247 = vld [vmem:[%s1 + $0x4a4] sm:$0xff]
  %v248 = vld [vmem:[%s1 + $0x4ac] sm:$0xf]
  %v249 = vld [vmem:[%s1 + $0x4b0] sm:$0xff]
  %v250 = vld [vmem:[%s1 + $0x4b8] sm:$0xf]
  %v251 = vld [vmem:[%s1 + $0x4bc] sm:$0xff]
  %v252 = vld [vmem:[%s1 + $0x4c4] sm:$0xf]
  %v253 = vld [vmem:[%s1 + $0x4c8] sm:$0xff]
  %v254 = vld [vmem:[%s1 + $0x4d0] sm:$0xf]
  %v255 = vld [vmem:[%s1 + $0x4d4] sm:$0xff]
  %v256 = vld [vmem:[%s1 + $0x4dc] sm:$0xf]
  %v257 = vld [vmem:[%s1 + $0x4e0] sm:$0xff]
  %v258 = vld [vmem:[%s1 + $0x4e8] sm:$0xf]
  %v259 = vld [vmem:[%s1 + $0x4ec] sm:$0xff]
  %v260 = vld [vmem:[%s1 + $0x4f4] sm:$0xf]
  %v261 = vld [vmem:[%s1 + $0x4f8] sm:$0xff]
  %v262 = vld [vmem:[%s1 + $0x500] sm:$0xf]
  %v263 = vld [vmem:[%s1 + $0x504] sm:$0xff]
  %v264 = vld [vmem:[%s1 + $0x50c] sm:$0xf]
  %v265 = vld [vmem:[%s1 + $0x510] sm:$0xff]
  %v266 = vld [vmem:[%s1 + $0x518] sm:$0xf]
  %v267 = vld [vmem:[%s1 + $0x51c] sm:$0xff]
  %v268 = vld [vmem:[%s1 + $0x524] sm:$0xf]
  %v269 = vld [vmem:[%s1 + $0x528] sm:$0xff]
  %v270 = vld [vmem:[%s1 + $0x530] sm:$0xf]
  %v271 = vld [vmem:[%s1 + $0x534] sm:$0xff]
  %v272 = vld [vmem:[%s1 + $0x53c] sm:$0xf]
  %v273 = vld [vmem:[%s1 + $0x540] sm:$0xff]
  %v274 = vld [vmem:[%s1 + $0x548] sm:$0xf]
  %v275 = vld [vmem:[%s1 + $0x54c] sm:$0xff]
  %v276 = vld [vmem:[%s1 + $0x554] sm:$0xf]
  %v277 = vld [vmem:[%s1 + $0x558] sm:$0xff]
  %v278 = vld [vmem:[%s1 + $0x560] sm:$0xf]
  %v279 = vld [vmem:[%s1 + $0x564] sm:$0xff]
  %v280 = vld [vmem:[%s1 + $0x56c] sm:$0xf]
  %v281 = vld [vmem:[%s1 + $0x570] sm:$0xff]
  %v282 = vld [vmem:[%s1 + $0x578] sm:$0xf]
  %v283 = vld [vmem:[%s1 + $0x57c] sm:$0xff]
  %v284 = vld [vmem:[%s1 + $0x584] sm:$0xf]
  %v285 = vld [vmem:[%s1 + $0x588] sm:$0xff]
  %v286 = vld [vmem:[%s1 + $0x590] sm:$0xf]
  %v287 = vld [vmem:[%s1 + $0x594] sm:$0xff]
  %v288 = vld [vmem:[%s1 + $0x59c] sm:$0xf]
  %v289 = vld [vmem:[%s1 + $0x5a0] sm:$0xff]
  %v290 = vld [vmem:[%s1 + $0x5a8] sm:$0xf]
  %v291 = vld [vmem:[%s1 + $0x5ac] sm:$0xff]
  %v292 = vld [vmem:[%s1 + $0x5b4] sm:$0xf]
  %v293 = vld [vmem:[%s1 + $0x5b8] sm:$0xff]
  %v294 = vld [vmem:[%s1 + $0x5c0] sm:$0xf]
  %v295 = vld [vmem:[%s1 + $0x5c4] sm:$0xff]
  %v296 = vld [vmem:[%s1 + $0x5cc] sm:$0xf]
  %v297 = vld [vmem:[%s1 + $0x5d0] sm:$0xff]
  %v298 = vld [vmem:[%s1 + $0x5d8] sm:$0xf]
  %v299 = vld [vmem:[%s1 + $0x5dc] sm:$0xff]
  %v300 = vld [vmem:[%s1 + $0x5e4] sm:$0xf]
  %v301 = vld [vmem:[%s1 + $0x5e8] sm:$0xff]
  %v302 = vld [vmem:[%s1 + $0x5f0] sm:$0xf]
  %v303 = vld [vmem:[%s1 + $0x5f4] sm:$0xff]
  %v304 = vld [vmem:[%s1 + $0x5fc] sm:$0xf]
  %v313 = vunpack.c.l.b16 %v41
  %v314 = vunpack.c.h.b16 %v41
  %v315 = vunpack.c.l.b16 %v42
  %v316 = vunpack.c.h.b16 %v42
  %v317 = vunpack.c.l.b16 %v43
  %v318 = vunpack.c.h.b16 %v43
  %v319 = vunpack.c.l.b16 %v44
  %v320 = vunpack.c.h.b16 %v44
  %v321 = vunpack.c.l.b16 %v45
  %v322 = vunpack.c.h.b16 %v45
  %v323 = vunpack.c.l.b16 %v46
  %v324 = vunpack.c.h.b16 %v46
  %v325 = vunpack.c.l.b16 %v47
  %v326 = vunpack.c.h.b16 %v47
  %v327 = vunpack.c.l.b16 %v48
  %v328 = vunpack.c.h.b16 %v48
  %v329 = vpack.c.b16 %v321, %v313
  %v330 = vpack.c.b16 %v322, %v314
  %v331 = vpack.c.b16 %v323, %v315
  %v332 = vpack.c.b16 %v324, %v316
  %v333 = vpack.c.b16 %v325, %v317
  %v334 = vpack.c.b16 %v326, %v318
  %v335 = vpack.c.b16 %v327, %v319
  %v336 = vpack.c.b16 %v328, %v320
  %v601 = vunpack.c.l.b16 %v49
  %v602 = vunpack.c.h.b16 %v49
  %v603 = vunpack.c.l.b16 %v50
  %v604 = vunpack.c.l.b16 %v51
  %v605 = vunpack.c.h.b16 %v51
  %v606 = vunpack.c.l.b16 %v52
  %v607 = vunpack.c.l.b16 %v53
  %v608 = vunpack.c.h.b16 %v53
  %v609 = vunpack.c.l.b16 %v54
  %v610 = vunpack.c.l.b16 %v55
  %v611 = vunpack.c.h.b16 %v55
  %v612 = vunpack.c.l.b16 %v56
  %v613 = vunpack.c.l.b16 %v57
  %v614 = vunpack.c.h.b16 %v57
  %v615 = vunpack.c.l.b16 %v58
  %v616 = vunpack.c.l.b16 %v59
  %v617 = vunpack.c.h.b16 %v59
  %v618 = vunpack.c.l.b16 %v60
  %v619 = vunpack.c.l.b16 %v61
  %v620 = vunpack.c.h.b16 %v61
  %v621 = vunpack.c.l.b16 %v62
  %v622 = vunpack.c.l.b16 %v63
  %v623 = vunpack.c.h.b16 %v63
  %v624 = vunpack.c.l.b16 %v64
  %v625 = vunpack.c.l.b16 %v65
  %v626 = vunpack.c.h.b16 %v65
  %v627 = vunpack.c.l.b16 %v66
  %v628 = vunpack.c.l.b16 %v67
  %v629 = vunpack.c.h.b16 %v67
  %v630 = vunpack.c.l.b16 %v68
  %v631 = vunpack.c.l.b16 %v69
  %v632 = vunpack.c.h.b16 %v69
  %v633 = vunpack.c.l.b16 %v70
  %v634 = vunpack.c.l.b16 %v71
  %v635 = vunpack.c.h.b16 %v71
  %v636 = vunpack.c.l.b16 %v72
  %v637 = vunpack.c.l.b16 %v73
  %v638 = vunpack.c.h.b16 %v73
  %v639 = vunpack.c.l.b16 %v74
  %v640 = vunpack.c.l.b16 %v75
  %v641 = vunpack.c.h.b16 %v75
  %v642 = vunpack.c.l.b16 %v76
  %v643 = vunpack.c.l.b16 %v77
  %v644 = vunpack.c.h.b16 %v77
  %v645 = vunpack.c.l.b16 %v78
  %v646 = vunpack.c.l.b16 %v79
  %v647 = vunpack.c.h.b16 %v79
  %v648 = vunpack.c.l.b16 %v80
  %v649 = vunpack.c.l.b16 %v81
  %v650 = vunpack.c.h.b16 %v81
  %v651 = vunpack.c.l.b16 %v82
  %v652 = vunpack.c.l.b16 %v83
  %v653 = vunpack.c.h.b16 %v83
  %v654 = vunpack.c.l.b16 %v84
  %v655 = vunpack.c.l.b16 %v85
  %v656 = vunpack.c.h.b16 %v85
  %v657 = vunpack.c.l.b16 %v86
  %v658 = vunpack.c.l.b16 %v87
  %v659 = vunpack.c.h.b16 %v87
  %v660 = vunpack.c.l.b16 %v88
  %v661 = vunpack.c.l.b16 %v89
  %v662 = vunpack.c.h.b16 %v89
  %v663 = vunpack.c.l.b16 %v90
  %v664 = vunpack.c.l.b16 %v91
  %v665 = vunpack.c.h.b16 %v91
  %v666 = vunpack.c.l.b16 %v92
  %v667 = vunpack.c.l.b16 %v93
  %v668 = vunpack.c.h.b16 %v93
  %v669 = vunpack.c.l.b16 %v94
  %v670 = vunpack.c.l.b16 %v95
  %v671 = vunpack.c.h.b16 %v95
  %v672 = vunpack.c.l.b16 %v96
  %v673 = vunpack.c.l.b16 %v97
  %v674 = vunpack.c.h.b16 %v97
  %v675 = vunpack.c.l.b16 %v98
  %v676 = vunpack.c.l.b16 %v99
  %v677 = vunpack.c.h.b16 %v99
  %v678 = vunpack.c.l.b16 %v100
  %v679 = vunpack.c.l.b16 %v101
  %v680 = vunpack.c.h.b16 %v101
  %v681 = vunpack.c.l.b16 %v102
  %v682 = vunpack.c.l.b16 %v103
  %v683 = vunpack.c.h.b16 %v103
  %v684 = vunpack.c.l.b16 %v104
  %v685 = vunpack.c.l.b16 %v105
  %v686 = vunpack.c.h.b16 %v105
  %v687 = vunpack.c.l.b16 %v106
  %v688 = vunpack.c.l.b16 %v107
  %v689 = vunpack.c.h.b16 %v107
  %v690 = vunpack.c.l.b16 %v108
  %v691 = vunpack.c.l.b16 %v109
  %v692 = vunpack.c.h.b16 %v109
  %v693 = vunpack.c.l.b16 %v110
  %v694 = vunpack.c.l.b16 %v111
  %v695 = vunpack.c.h.b16 %v111
  %v696 = vunpack.c.l.b16 %v112
  %v697 = vunpack.c.l.b16 %v113
  %v698 = vunpack.c.h.b16 %v113
  %v699 = vunpack.c.l.b16 %v114
  %v700 = vunpack.c.l.b16 %v115
  %v701 = vunpack.c.h.b16 %v115
  %v702 = vunpack.c.l.b16 %v116
  %v703 = vunpack.c.l.b16 %v117
  %v704 = vunpack.c.h.b16 %v117
  %v705 = vunpack.c.l.b16 %v118
  %v706 = vunpack.c.l.b16 %v119
  %v707 = vunpack.c.h.b16 %v119
  %v708 = vunpack.c.l.b16 %v120
  %v709 = vunpack.c.l.b16 %v121
  %v710 = vunpack.c.h.b16 %v121
  %v711 = vunpack.c.l.b16 %v122
  %v712 = vunpack.c.l.b16 %v123
  %v713 = vunpack.c.h.b16 %v123
  %v714 = vunpack.c.l.b16 %v124
  %v715 = vunpack.c.l.b16 %v125
  %v716 = vunpack.c.h.b16 %v125
  %v717 = vunpack.c.l.b16 %v126
  %v718 = vunpack.c.l.b16 %v127
  %v719 = vunpack.c.h.b16 %v127
  %v720 = vunpack.c.l.b16 %v128
  %v721 = vunpack.c.l.b16 %v129
  %v722 = vunpack.c.h.b16 %v129
  %v723 = vunpack.c.l.b16 %v130
  %v724 = vunpack.c.l.b16 %v131
  %v725 = vunpack.c.h.b16 %v131
  %v726 = vunpack.c.l.b16 %v132
  %v727 = vunpack.c.l.b16 %v133
  %v728 = vunpack.c.h.b16 %v133
  %v729 = vunpack.c.l.b16 %v134
  %v730 = vunpack.c.l.b16 %v135
  %v731 = vunpack.c.h.b16 %v135
  %v732 = vunpack.c.l.b16 %v136
  %v733 = vunpack.c.l.b16 %v137
  %v734 = vunpack.c.h.b16 %v137
  %v735 = vunpack.c.l.b16 %v138
  %v736 = vunpack.c.l.b16 %v139
  %v737 = vunpack.c.h.b16 %v139
  %v738 = vunpack.c.l.b16 %v140
  %v739 = vunpack.c.l.b16 %v141
  %v740 = vunpack.c.h.b16 %v141
  %v741 = vunpack.c.l.b16 %v142
  %v742 = vunpack.c.l.b16 %v143
  %v743 = vunpack.c.h.b16 %v143
  %v744 = vunpack.c.l.b16 %v144
  %v745 = vunpack.c.l.b16 %v145
  %v746 = vunpack.c.h.b16 %v145
  %v747 = vunpack.c.l.b16 %v146
  %v748 = vunpack.c.l.b16 %v147
  %v749 = vunpack.c.h.b16 %v147
  %v750 = vunpack.c.l.b16 %v148
  %v751 = vunpack.c.l.b16 %v149
  %v752 = vunpack.c.h.b16 %v149
  %v753 = vunpack.c.l.b16 %v150
  %v754 = vunpack.c.l.b16 %v151
  %v755 = vunpack.c.h.b16 %v151
  %v756 = vunpack.c.l.b16 %v152
  %v757 = vunpack.c.l.b16 %v153
  %v758 = vunpack.c.h.b16 %v153
  %v759 = vunpack.c.l.b16 %v154
  %v760 = vunpack.c.l.b16 %v155
  %v761 = vunpack.c.h.b16 %v155
  %v762 = vunpack.c.l.b16 %v156
  %v763 = vunpack.c.l.b16 %v157
  %v764 = vunpack.c.h.b16 %v157
  %v765 = vunpack.c.l.b16 %v158
  %v766 = vunpack.c.l.b16 %v159
  %v767 = vunpack.c.h.b16 %v159
  %v768 = vunpack.c.l.b16 %v160
  %v769 = vunpack.c.l.b16 %v161
  %v770 = vunpack.c.h.b16 %v161
  %v771 = vunpack.c.l.b16 %v162
  %v772 = vunpack.c.l.b16 %v163
  %v773 = vunpack.c.h.b16 %v163
  %v774 = vunpack.c.l.b16 %v164
  %v775 = vunpack.c.l.b16 %v165
  %v776 = vunpack.c.h.b16 %v165
  %v777 = vunpack.c.l.b16 %v166
  %v778 = vunpack.c.l.b16 %v167
  %v779 = vunpack.c.h.b16 %v167
  %v780 = vunpack.c.l.b16 %v168
  %v781 = vunpack.c.l.b16 %v169
  %v782 = vunpack.c.h.b16 %v169
  %v783 = vunpack.c.l.b16 %v170
  %v784 = vunpack.c.l.b16 %v171
  %v785 = vunpack.c.h.b16 %v171
  %v786 = vunpack.c.l.b16 %v172
  %v787 = vunpack.c.l.b16 %v173
  %v788 = vunpack.c.h.b16 %v173
  %v789 = vunpack.c.l.b16 %v174
  %v790 = vunpack.c.l.b16 %v175
  %v791 = vunpack.c.h.b16 %v175
  %v792 = vunpack.c.l.b16 %v176
  %v793 = vunpack.c.l.b16 %v177
  %v794 = vunpack.c.h.b16 %v177
  %v795 = vunpack.c.l.b16 %v178
  %v796 = vunpack.c.l.b16 %v179
  %v797 = vunpack.c.h.b16 %v179
  %v798 = vunpack.c.l.b16 %v180
  %v799 = vunpack.c.l.b16 %v181
  %v800 = vunpack.c.h.b16 %v181
  %v801 = vunpack.c.l.b16 %v182
  %v802 = vunpack.c.l.b16 %v183
  %v803 = vunpack.c.h.b16 %v183
  %v804 = vunpack.c.l.b16 %v184
  %v805 = vunpack.c.l.b16 %v185
  %v806 = vunpack.c.h.b16 %v185
  %v807 = vunpack.c.l.b16 %v186
  %v808 = vunpack.c.l.b16 %v187
  %v809 = vunpack.c.h.b16 %v187
  %v810 = vunpack.c.l.b16 %v188
  %v811 = vunpack.c.l.b16 %v189
  %v812 = vunpack.c.h.b16 %v189
  %v813 = vunpack.c.l.b16 %v190
  %v814 = vunpack.c.l.b16 %v191
  %v815 = vunpack.c.h.b16 %v191
  %v816 = vunpack.c.l.b16 %v192
  %v817 = vunpack.c.l.b16 %v193
  %v818 = vunpack.c.h.b16 %v193
  %v819 = vunpack.c.l.b16 %v194
  %v820 = vunpack.c.l.b16 %v195
  %v821 = vunpack.c.h.b16 %v195
  %v822 = vunpack.c.l.b16 %v196
  %v823 = vunpack.c.l.b16 %v197
  %v824 = vunpack.c.h.b16 %v197
  %v825 = vunpack.c.l.b16 %v198
  %v826 = vunpack.c.l.b16 %v199
  %v827 = vunpack.c.h.b16 %v199
  %v828 = vunpack.c.l.b16 %v200
  %v829 = vunpack.c.l.b16 %v201
  %v830 = vunpack.c.h.b16 %v201
  %v831 = vunpack.c.l.b16 %v202
  %v832 = vunpack.c.l.b16 %v203
  %v833 = vunpack.c.h.b16 %v203
  %v834 = vunpack.c.l.b16 %v204
  %v835 = vunpack.c.l.b16 %v205
  %v836 = vunpack.c.h.b16 %v205
  %v837 = vunpack.c.l.b16 %v206
  %v838 = vunpack.c.l.b16 %v207
  %v839 = vunpack.c.h.b16 %v207
  %v840 = vunpack.c.l.b16 %v208
  %v841 = vunpack.c.l.b16 %v209
  %v842 = vunpack.c.h.b16 %v209
  %v843 = vunpack.c.l.b16 %v210
  %v844 = vunpack.c.l.b16 %v211
  %v845 = vunpack.c.h.b16 %v211
  %v846 = vunpack.c.l.b16 %v212
  %v847 = vunpack.c.l.b16 %v213
  %v848 = vunpack.c.h.b16 %v213
  %v849 = vunpack.c.l.b16 %v214
  %v850 = vunpack.c.l.b16 %v215
  %v851 = vunpack.c.h.b16 %v215
  %v852 = vunpack.c.l.b16 %v216
  %v853 = vunpack.c.l.b16 %v217
  %v854 = vunpack.c.h.b16 %v217
  %v855 = vunpack.c.l.b16 %v218
  %v856 = vunpack.c.l.b16 %v219
  %v857 = vunpack.c.h.b16 %v219
  %v858 = vunpack.c.l.b16 %v220
  %v859 = vunpack.c.l.b16 %v221
  %v860 = vunpack.c.h.b16 %v221
  %v861 = vunpack.c.l.b16 %v222
  %v862 = vunpack.c.l.b16 %v223
  %v863 = vunpack.c.h.b16 %v223
  %v864 = vunpack.c.l.b16 %v224
  %v865 = vunpack.c.l.b16 %v225
  %v866 = vunpack.c.h.b16 %v225
  %v867 = vunpack.c.l.b16 %v226
  %v868 = vunpack.c.l.b16 %v227
  %v869 = vunpack.c.h.b16 %v227
  %v870 = vunpack.c.l.b16 %v228
  %v871 = vunpack.c.l.b16 %v229
  %v872 = vunpack.c.h.b16 %v229
  %v873 = vunpack.c.l.b16 %v230
  %v874 = vunpack.c.l.b16 %v231
  %v875 = vunpack.c.h.b16 %v231
  %v876 = vunpack.c.l.b16 %v232
  %v877 = vunpack.c.l.b16 %v233
  %v878 = vunpack.c.h.b16 %v233
  %v879 = vunpack.c.l.b16 %v234
  %v880 = vunpack.c.l.b16 %v235
  %v881 = vunpack.c.h.b16 %v235
  %v882 = vunpack.c.l.b16 %v236
  %v883 = vunpack.c.l.b16 %v237
  %v884 = vunpack.c.h.b16 %v237
  %v885 = vunpack.c.l.b16 %v238
  %v886 = vunpack.c.l.b16 %v239
  %v887 = vunpack.c.h.b16 %v239
  %v888 = vunpack.c.l.b16 %v240
  %v889 = vunpack.c.l.b16 %v241
  %v890 = vunpack.c.h.b16 %v241
  %v891 = vunpack.c.l.b16 %v242
  %v892 = vunpack.c.l.b16 %v243
  %v893 = vunpack.c.h.b16 %v243
  %v894 = vunpack.c.l.b16 %v244
  %v895 = vunpack.c.l.b16 %v245
  %v896 = vunpack.c.h.b16 %v245
  %v897 = vunpack.c.l.b16 %v246
  %v898 = vunpack.c.l.b16 %v247
  %v899 = vunpack.c.h.b16 %v247
  %v900 = vunpack.c.l.b16 %v248
  %v901 = vunpack.c.l.b16 %v249
  %v902 = vunpack.c.h.b16 %v249
  %v903 = vunpack.c.l.b16 %v250
  %v904 = vunpack.c.l.b16 %v251
  %v905 = vunpack.c.h.b16 %v251
  %v906 = vunpack.c.l.b16 %v252
  %v907 = vunpack.c.l.b16 %v253
  %v908 = vunpack.c.h.b16 %v253
  %v909 = vunpack.c.l.b16 %v254
  %v910 = vunpack.c.l.b16 %v255
  %v911 = vunpack.c.h.b16 %v255
  %v912 = vunpack.c.l.b16 %v256
  %v913 = vunpack.c.l.b16 %v257
  %v914 = vunpack.c.h.b16 %v257
  %v915 = vunpack.c.l.b16 %v258
  %v916 = vunpack.c.l.b16 %v259
  %v917 = vunpack.c.h.b16 %v259
  %v918 = vunpack.c.l.b16 %v260
  %v919 = vunpack.c.l.b16 %v261
  %v920 = vunpack.c.h.b16 %v261
  %v921 = vunpack.c.l.b16 %v262
  %v922 = vunpack.c.l.b16 %v263
  %v923 = vunpack.c.h.b16 %v263
  %v924 = vunpack.c.l.b16 %v264
  %v925 = vunpack.c.l.b16 %v265
  %v926 = vunpack.c.h.b16 %v265
  %v927 = vunpack.c.l.b16 %v266
  %v928 = vunpack.c.l.b16 %v267
  %v929 = vunpack.c.h.b16 %v267
  %v930 = vunpack.c.l.b16 %v268
  %v931 = vunpack.c.l.b16 %v269
  %v932 = vunpack.c.h.b16 %v269
  %v933 = vunpack.c.l.b16 %v270
  %v934 = vunpack.c.l.b16 %v271
  %v935 = vunpack.c.h.b16 %v271
  %v936 = vunpack.c.l.b16 %v272
  %v937 = vunpack.c.l.b16 %v273
  %v938 = vunpack.c.h.b16 %v273
  %v939 = vunpack.c.l.b16 %v274
  %v940 = vunpack.c.l.b16 %v275
  %v941 = vunpack.c.h.b16 %v275
  %v942 = vunpack.c.l.b16 %v276
  %v943 = vunpack.c.l.b16 %v277
  %v944 = vunpack.c.h.b16 %v277
  %v945 = vunpack.c.l.b16 %v278
  %v946 = vunpack.c.l.b16 %v279
  %v947 = vunpack.c.h.b16 %v279
  %v948 = vunpack.c.l.b16 %v280
  %v949 = vunpack.c.l.b16 %v281
  %v950 = vunpack.c.h.b16 %v281
  %v951 = vunpack.c.l.b16 %v282
  %v952 = vunpack.c.l.b16 %v283
  %v953 = vunpack.c.h.b16 %v283
  %v954 = vunpack.c.l.b16 %v284
  %v955 = vunpack.c.l.b16 %v285
  %v956 = vunpack.c.h.b16 %v285
  %v957 = vunpack.c.l.b16 %v286
  %v958 = vunpack.c.l.b16 %v287
  %v959 = vunpack.c.h.b16 %v287
  %v960 = vunpack.c.l.b16 %v288
  %v961 = vunpack.c.l.b16 %v289
  %v962 = vunpack.c.h.b16 %v289
  %v963 = vunpack.c.l.b16 %v290
  %v964 = vunpack.c.l.b16 %v291
  %v965 = vunpack.c.h.b16 %v291
  %v966 = vunpack.c.l.b16 %v292
  %v967 = vunpack.c.l.b16 %v293
  %v968 = vunpack.c.h.b16 %v293
  %v969 = vunpack.c.l.b16 %v294
  %v970 = vunpack.c.l.b16 %v295
  %v971 = vunpack.c.h.b16 %v295
  %v972 = vunpack.c.l.b16 %v296
  %v973 = vunpack.c.l.b16 %v297
  %v974 = vunpack.c.h.b16 %v297
  %v975 = vunpack.c.l.b16 %v298
  %v976 = vunpack.c.l.b16 %v299
  %v977 = vunpack.c.h.b16 %v299
  %v978 = vunpack.c.l.b16 %v300
  %v979 = vunpack.c.l.b16 %v301
  %v980 = vunpack.c.h.b16 %v301
  %v981 = vunpack.c.l.b16 %v302
  %v982 = vunpack.c.l.b16 %v303
  %v983 = vunpack.c.h.b16 %v303
  %v984 = vunpack.c.l.b16 %v304
  %v985 = vpack.c.b16 %v604, %v601
  %v986 = vpack.c.b16 %v605, %v602
  %v987 = vpack.c.b16 %v606, %v603
  %v988 = vpack.c.b16 %v610, %v607
  %v989 = vpack.c.b16 %v611, %v608
  %v990 = vpack.c.b16 %v612, %v609
  %v991 = vpack.c.b16 %v616, %v613
  %v992 = vpack.c.b16 %v617, %v614
  %v993 = vpack.c.b16 %v618, %v615
  %v994 = vpack.c.b16 %v622, %v619
  %v995 = vpack.c.b16 %v623, %v620
  %v996 = vpack.c.b16 %v624, %v621
  %v997 = vpack.c.b16 %v628, %v625
  %v998 = vpack.c.b16 %v629, %v626
  %v999 = vpack.c.b16 %v630, %v627
  %v1000 = vpack.c.b16 %v634, %v631
  %v1001 = vpack.c.b16 %v635, %v632
  %v1002 = vpack.c.b16 %v636, %v633
  %v1003 = vpack.c.b16 %v640, %v637
  %v1004 = vpack.c.b16 %v641, %v638
  %v1005 = vpack.c.b16 %v642, %v639
  %v1006 = vpack.c.b16 %v646, %v643
  %v1007 = vpack.c.b16 %v647, %v644
  %v1008 = vpack.c.b16 %v648, %v645
  %v1009 = vpack.c.b16 %v652, %v649
  %v1010 = vpack.c.b16 %v653, %v650
  %v1011 = vpack.c.b16 %v654, %v651
  %v1012 = vpack.c.b16 %v658, %v655
  %v1013 = vpack.c.b16 %v659, %v656
  %v1014 = vpack.c.b16 %v660, %v657
  %v1015 = vpack.c.b16 %v664, %v661
  %v1016 = vpack.c.b16 %v665, %v662
  %v1017 = vpack.c.b16 %v666, %v663
  %v1018 = vpack.c.b16 %v670, %v667
  %v1019 = vpack.c.b16 %v671, %v668
  %v1020 = vpack.c.b16 %v672, %v669
  %v1021 = vpack.c.b16 %v676, %v673
  %v1022 = vpack.c.b16 %v677, %v674
  %v1023 = vpack.c.b16 %v678, %v675
  %v1024 = vpack.c.b16 %v682, %v679
  %v1025 = vpack.c.b16 %v683, %v680
  %v1026 = vpack.c.b16 %v684, %v681
  %v1027 = vpack.c.b16 %v688, %v685
  %v1028 = vpack.c.b16 %v689, %v686
  %v1029 = vpack.c.b16 %v690, %v687
  %v1030 = vpack.c.b16 %v694, %v691
  %v1031 = vpack.c.b16 %v695, %v692
  %v1032 = vpack.c.b16 %v696, %v693
  %v1033 = vpack.c.b16 %v700, %v697
  %v1034 = vpack.c.b16 %v701, %v698
  %v1035 = vpack.c.b16 %v702, %v699
  %v1036 = vpack.c.b16 %v706, %v703
  %v1037 = vpack.c.b16 %v707, %v704
  %v1038 = vpack.c.b16 %v708, %v705
  %v1039 = vpack.c.b16 %v712, %v709
  %v1040 = vpack.c.b16 %v713, %v710
  %v1041 = vpack.c.b16 %v714, %v711
  %v1042 = vpack.c.b16 %v718, %v715
  %v1043 = vpack.c.b16 %v719, %v716
  %v1044 = vpack.c.b16 %v720, %v717
  %v1045 = vpack.c.b16 %v724, %v721
  %v1046 = vpack.c.b16 %v725, %v722
  %v1047 = vpack.c.b16 %v726, %v723
  %v1048 = vpack.c.b16 %v730, %v727
  %v1049 = vpack.c.b16 %v731, %v728
  %v1050 = vpack.c.b16 %v732, %v729
  %v1051 = vpack.c.b16 %v736, %v733
  %v1052 = vpack.c.b16 %v737, %v734
  %v1053 = vpack.c.b16 %v738, %v735
  %v1054 = vpack.c.b16 %v742, %v739
  %v1055 = vpack.c.b16 %v743, %v740
  %v1056 = vpack.c.b16 %v744, %v741
  %v1057 = vpack.c.b16 %v748, %v745
  %v1058 = vpack.c.b16 %v749, %v746
  %v1059 = vpack.c.b16 %v750, %v747
  %v1060 = vpack.c.b16 %v754, %v751
  %v1061 = vpack.c.b16 %v755, %v752
  %v1062 = vpack.c.b16 %v756, %v753
  %v1063 = vpack.c.b16 %v760, %v757
  %v1064 = vpack.c.b16 %v761, %v758
  %v1065 = vpack.c.b16 %v762, %v759
  %v1066 = vpack.c.b16 %v766, %v763
  %v1067 = vpack.c.b16 %v767, %v764
  %v1068 = vpack.c.b16 %v768, %v765
  %v1069 = vpack.c.b16 %v772, %v769
  %v1070 = vpack.c.b16 %v773, %v770
  %v1071 = vpack.c.b16 %v774, %v771
  %v1072 = vpack.c.b16 %v778, %v775
  %v1073 = vpack.c.b16 %v779, %v776
  %v1074 = vpack.c.b16 %v780, %v777
  %v1075 = vpack.c.b16 %v784, %v781
  %v1076 = vpack.c.b16 %v785, %v782
  %v1077 = vpack.c.b16 %v786, %v783
  %v1078 = vpack.c.b16 %v790, %v787
  %v1079 = vpack.c.b16 %v791, %v788
  %v1080 = vpack.c.b16 %v792, %v789
  %v1081 = vpack.c.b16 %v796, %v793
  %v1082 = vpack.c.b16 %v797, %v794
  %v1083 = vpack.c.b16 %v798, %v795
  %v1084 = vpack.c.b16 %v802, %v799
  %v1085 = vpack.c.b16 %v803, %v800
  %v1086 = vpack.c.b16 %v804, %v801
  %v1087 = vpack.c.b16 %v808, %v805
  %v1088 = vpack.c.b16 %v809, %v806
  %v1089 = vpack.c.b16 %v810, %v807
  %v1090 = vpack.c.b16 %v814, %v811
  %v1091 = vpack.c.b16 %v815, %v812
  %v1092 = vpack.c.b16 %v816, %v813
  %v1093 = vpack.c.b16 %v820, %v817
  %v1094 = vpack.c.b16 %v821, %v818
  %v1095 = vpack.c.b16 %v822, %v819
  %v1096 = vpack.c.b16 %v826, %v823
  %v1097 = vpack.c.b16 %v827, %v824
  %v1098 = vpack.c.b16 %v828, %v825
  %v1099 = vpack.c.b16 %v832, %v829
  %v1100 = vpack.c.b16 %v833, %v830
  %v1101 = vpack.c.b16 %v834, %v831
  %v1102 = vpack.c.b16 %v838, %v835
  %v1103 = vpack.c.b16 %v839, %v836
  %v1104 = vpack.c.b16 %v840, %v837
  %v1105 = vpack.c.b16 %v844, %v841
  %v1106 = vpack.c.b16 %v845, %v842
  %v1107 = vpack.c.b16 %v846, %v843
  %v1108 = vpack.c.b16 %v850, %v847
  %v1109 = vpack.c.b16 %v851, %v848
  %v1110 = vpack.c.b16 %v852, %v849
  %v1111 = vpack.c.b16 %v856, %v853
  %v1112 = vpack.c.b16 %v857, %v854
  %v1113 = vpack.c.b16 %v858, %v855
  %v1114 = vpack.c.b16 %v862, %v859
  %v1115 = vpack.c.b16 %v863, %v860
  %v1116 = vpack.c.b16 %v864, %v861
  %v1117 = vpack.c.b16 %v868, %v865
  %v1118 = vpack.c.b16 %v869, %v866
  %v1119 = vpack.c.b16 %v870, %v867
  %v1120 = vpack.c.b16 %v874, %v871
  %v1121 = vpack.c.b16 %v875, %v872
  %v1122 = vpack.c.b16 %v876, %v873
  %v1123 = vpack.c.b16 %v880, %v877
  %v1124 = vpack.c.b16 %v881, %v878
  %v1125 = vpack.c.b16 %v882, %v879
  %v1126 = vpack.c.b16 %v886, %v883
  %v1127 = vpack.c.b16 %v887, %v884
  %v1128 = vpack.c.b16 %v888, %v885
  %v1129 = vpack.c.b16 %v892, %v889
  %v1130 = vpack.c.b16 %v893, %v890
  %v1131 = vpack.c.b16 %v894, %v891
  %v1132 = vpack.c.b16 %v898, %v895
  %v1133 = vpack.c.b16 %v899, %v896
  %v1134 = vpack.c.b16 %v900, %v897
  %v1135 = vpack.c.b16 %v904, %v901
  %v1136 = vpack.c.b16 %v905, %v902
  %v1137 = vpack.c.b16 %v906, %v903
  %v1138 = vpack.c.b16 %v910, %v907
  %v1139 = vpack.c.b16 %v911, %v908
  %v1140 = vpack.c.b16 %v912, %v909
  %v1141 = vpack.c.b16 %v916, %v913
  %v1142 = vpack.c.b16 %v917, %v914
  %v1143 = vpack.c.b16 %v918, %v915
  %v1144 = vpack.c.b16 %v922, %v919
  %v1145 = vpack.c.b16 %v923, %v920
  %v1146 = vpack.c.b16 %v924, %v921
  %v1147 = vpack.c.b16 %v928, %v925
  %v1148 = vpack.c.b16 %v929, %v926
  %v1149 = vpack.c.b16 %v930, %v927
  %v1150 = vpack.c.b16 %v934, %v931
  %v1151 = vpack.c.b16 %v935, %v932
  %v1152 = vpack.c.b16 %v936, %v933
  %v1153 = vpack.c.b16 %v940, %v937
  %v1154 = vpack.c.b16 %v941, %v938
  %v1155 = vpack.c.b16 %v942, %v939
  %v1156 = vpack.c.b16 %v946, %v943
  %v1157 = vpack.c.b16 %v947, %v944
  %v1158 = vpack.c.b16 %v948, %v945
  %v1159 = vpack.c.b16 %v952, %v949
  %v1160 = vpack.c.b16 %v953, %v950
  %v1161 = vpack.c.b16 %v954, %v951
  %v1162 = vpack.c.b16 %v958, %v955
  %v1163 = vpack.c.b16 %v959, %v956
  %v1164 = vpack.c.b16 %v960, %v957
  %v1165 = vpack.c.b16 %v964, %v961
  %v1166 = vpack.c.b16 %v965, %v962
  %v1167 = vpack.c.b16 %v966, %v963
  %v1168 = vpack.c.b16 %v970, %v967
  %v1169 = vpack.c.b16 %v971, %v968
  %v1170 = vpack.c.b16 %v972, %v969
  %v1171 = vpack.c.b16 %v976, %v973
  %v1172 = vpack.c.b16 %v977, %v974
  %v1173 = vpack.c.b16 %v978, %v975
  %v1174 = vpack.c.b16 %v982, %v979
  %v1175 = vpack.c.b16 %v983, %v980
  %v1176 = vpack.c.b16 %v984, %v981
  %1369 = vmatprep.subr.bf16.mxu0 %v986
  %1370 = vmatpush1.bf16.msra.mxu0 %v985
  %1371 = vmatprep.subr.bf16.mxu0 %v989
  %1372 = vmatpush1.bf16.msra.mxu0 %v988
  %1373 = vmatprep.subr.bf16.mxu0 %v992
  %1374 = vmatpush1.bf16.msra.mxu0 %v991
  %1375 = vmatprep.subr.bf16.mxu0 %v995
  %1376 = vmatpush1.bf16.msra.mxu0 %v994
  %1377 = vmatprep.subr.bf16.mxu0 %v998
  %1378 = vmatpush1.bf16.msra.mxu0 %v997
  %1379 = vmatprep.subr.bf16.mxu0 %v1001
  %1380 = vmatpush1.bf16.msra.mxu0 %v1000
  %1381 = vmatprep.subr.bf16.mxu0 %v1004
  %1382 = vmatpush1.bf16.msra.mxu0 %v1003
  %1383 = vmatprep.subr.bf16.mxu0 %v1007
  %1384 = vmatpush1.bf16.msra.mxu0 %v1006
  %1385 = vmatprep.subr.bf16.mxu0 %v1010
  %1386 = vmatpush1.bf16.msra.mxu0 %v1009
  %1387 = vmatprep.subr.bf16.mxu0 %v1013
  %1388 = vmatpush1.bf16.msra.mxu0 %v1012
  %1389 = vmatprep.subr.bf16.mxu0 %v1016
  %1390 = vmatpush1.bf16.msra.mxu0 %v1015
  %1391 = vmatprep.subr.bf16.mxu0 %v1019
  %1392 = vmatpush1.bf16.msra.mxu0 %v1018
  %1393 = vmatprep.subr.bf16.mxu0 %v1022
  %1394 = vmatpush1.bf16.msra.mxu0 %v1021
  %1395 = vmatprep.subr.bf16.mxu0 %v1025
  %1396 = vmatpush1.bf16.msra.mxu0 %v1024
  %1397 = vmatprep.subr.bf16.mxu0 %v1028
  %1398 = vmatpush1.bf16.msra.mxu0 %v1027
  %1399 = vmatprep.subr.bf16.mxu0 %v1031
  %1400 = vmatpush1.bf16.msra.mxu0 %v1030
  %1401 = vmatprep.mubr.bf16.mxu0 %v330
  %1402 = vmatmul.mubr.bf16.gmra.mrb[0].mxu0 %v329
  %v1403 = vpop.f32.mrb[0].mxu0
  %v1404 = vadd.f32 0.0, %v1403
  %v1405 = vpop.f32.mrb[0].mxu0
  %v1406 = vadd.f32 0.0, %v1405
  %v1407 = vpop.f32.mrb[0].mxu0
  %v1408 = vadd.f32 0.0, %v1407
  %v1409 = vpop.f32.mrb[0].mxu0
  %v1410 = vadd.f32 0.0, %v1409
  %1411 = vdwg.mxu0
  %1412 = vmatprep.subr.bf16.mxu0 %v1034
  %1413 = vmatpush1.bf16.msra.mxu0 %v1033
  %1414 = vmatprep.subr.bf16.mxu0 %v1037
  %1415 = vmatpush1.bf16.msra.mxu0 %v1036
  %1416 = vmatprep.subr.bf16.mxu0 %v1040
  %1417 = vmatpush1.bf16.msra.mxu0 %v1039
  %1418 = vmatprep.subr.bf16.mxu0 %v1043
  %1419 = vmatpush1.bf16.msra.mxu0 %v1042
  %1420 = vmatprep.subr.bf16.mxu0 %v1046
  %1421 = vmatpush1.bf16.msra.mxu0 %v1045
  %1422 = vmatprep.subr.bf16.mxu0 %v1049
  %1423 = vmatpush1.bf16.msra.mxu0 %v1048
  %1424 = vmatprep.subr.bf16.mxu0 %v1052
  %1425 = vmatpush1.bf16.msra.mxu0 %v1051
  %1426 = vmatprep.subr.bf16.mxu0 %v1055
  %1427 = vmatpush1.bf16.msra.mxu0 %v1054
  %1428 = vmatprep.subr.bf16.mxu0 %v1058
  %1429 = vmatpush1.bf16.msra.mxu0 %v1057
  %1430 = vmatprep.subr.bf16.mxu0 %v1061
  %1431 = vmatpush1.bf16.msra.mxu0 %v1060
  %1432 = vmatprep.subr.bf16.mxu0 %v1064
  %1433 = vmatpush1.bf16.msra.mxu0 %v1063
  %1434 = vmatprep.subr.bf16.mxu0 %v1067
  %1435 = vmatpush1.bf16.msra.mxu0 %v1066
  %1436 = vmatprep.subr.bf16.mxu0 %v1070
  %1437 = vmatpush1.bf16.msra.mxu0 %v1069
  %1438 = vmatprep.subr.bf16.mxu0 %v1073
  %1439 = vmatpush1.bf16.msra.mxu0 %v1072
  %1440 = vmatprep.subr.bf16.mxu0 %v1076
  %1441 = vmatpush1.bf16.msra.mxu0 %v1075
  %1442 = vmatprep.subr.bf16.mxu0 %v1079
  %1443 = vmatpush1.bf16.msra.mxu0 %v1078
  %1444 = vmatprep.mubr.bf16.mxu0 %v332
  %1445 = vmatmul.mubr.bf16.gmra.mrb[0].mxu0 %v331
  %v1446 = vpop.f32.mrb[0].mxu0
  %v1447 = vadd.f32 %v1404, %v1446
  %v1448 = vpop.f32.mrb[0].mxu0
  %v1449 = vadd.f32 %v1406, %v1448
  %v1450 = vpop.f32.mrb[0].mxu0
  %v1451 = vadd.f32 %v1408, %v1450
  %v1452 = vpop.f32.mrb[0].mxu0
  %v1453 = vadd.f32 %v1410, %v1452
  %1454 = vdwg.mxu0
  %1455 = vmatprep.subr.bf16.mxu0 %v1082
  %1456 = vmatpush1.bf16.msra.mxu0 %v1081
  %1457 = vmatprep.subr.bf16.mxu0 %v1085
  %1458 = vmatpush1.bf16.msra.mxu0 %v1084
  %1459 = vmatprep.subr.bf16.mxu0 %v1088
  %1460 = vmatpush1.bf16.msra.mxu0 %v1087
  %1461 = vmatprep.subr.bf16.mxu0 %v1091
  %1462 = vmatpush1.bf16.msra.mxu0 %v1090
  %1463 = vmatprep.subr.bf16.mxu0 %v1094
  %1464 = vmatpush1.bf16.msra.mxu0 %v1093
  %1465 = vmatprep.subr.bf16.mxu0 %v1097
  %1466 = vmatpush1.bf16.msra.mxu0 %v1096
  %1467 = vmatprep.subr.bf16.mxu0 %v1100
  %1468 = vmatpush1.bf16.msra.mxu0 %v1099
  %1469 = vmatprep.subr.bf16.mxu0 %v1103
  %1470 = vmatpush1.bf16.msra.mxu0 %v1102
  %1471 = vmatprep.subr.bf16.mxu0 %v1106
  %1472 = vmatpush1.bf16.msra.mxu0 %v1105
  %1473 = vmatprep.subr.bf16.mxu0 %v1109
  %1474 = vmatpush1.bf16.msra.mxu0 %v1108
  %1475 = vmatprep.subr.bf16.mxu0 %v1112
  %1476 = vmatpush1.bf16.msra.mxu0 %v1111
  %1477 = vmatprep.subr.bf16.mxu0 %v1115
  %1478 = vmatpush1.bf16.msra.mxu0 %v1114
  %1479 = vmatprep.subr.bf16.mxu0 %v1118
  %1480 = vmatpush1.bf16.msra.mxu0 %v1117
  %1481 = vmatprep.subr.bf16.mxu0 %v1121
  %1482 = vmatpush1.bf16.msra.mxu0 %v1120
  %1483 = vmatprep.subr.bf16.mxu0 %v1124
  %1484 = vmatpush1.bf16.msra.mxu0 %v1123
  %1485 = vmatprep.subr.bf16.mxu0 %v1127
  %1486 = vmatpush1.bf16.msra.mxu0 %v1126
  %1487 = vmatprep.mubr.bf16.mxu0 %v334
  %1488 = vmatmul.mubr.bf16.gmra.mrb[0].mxu0 %v333
  %v1489 = vpop.f32.mrb[0].mxu0
  %v1490 = vadd.f32 %v1447, %v1489
  %v1491 = vpop.f32.mrb[0].mxu0
  %v1492 = vadd.f32 %v1449, %v1491
  %v1493 = vpop.f32.mrb[0].mxu0
  %v1494 = vadd.f32 %v1451, %v1493
  %v1495 = vpop.f32.mrb[0].mxu0
  %v1496 = vadd.f32 %v1453, %v1495
  %1497 = vdwg.mxu0
  %1498 = vmatprep.subr.bf16.mxu0 %v1130
  %1499 = vmatpush1.bf16.msra.mxu0 %v1129
  %1500 = vmatprep.subr.bf16.mxu0 %v1133
  %1501 = vmatpush1.bf16.msra.mxu0 %v1132
  %1502 = vmatprep.subr.bf16.mxu0 %v1136
  %1503 = vmatpush1.bf16.msra.mxu0 %v1135
  %1504 = vmatprep.subr.bf16.mxu0 %v1139
  %1505 = vmatpush1.bf16.msra.mxu0 %v1138
  %1506 = vmatprep.subr.bf16.mxu0 %v1142
  %1507 = vmatpush1.bf16.msra.mxu0 %v1141
  %1508 = vmatprep.subr.bf16.mxu0 %v1145
  %1509 = vmatpush1.bf16.msra.mxu0 %v1144
  %1510 = vmatprep.subr.bf16.mxu0 %v1148
  %1511 = vmatpush1.bf16.msra.mxu0 %v1147
  %1512 = vmatprep.subr.bf16.mxu0 %v1151
  %1513 = vmatpush1.bf16.msra.mxu0 %v1150
  %1514 = vmatprep.subr.bf16.mxu0 %v1154
  %1515 = vmatpush1.bf16.msra.mxu0 %v1153
  %1516 = vmatprep.subr.bf16.mxu0 %v1157
  %1517 = vmatpush1.bf16.msra.mxu0 %v1156
  %1518 = vmatprep.subr.bf16.mxu0 %v1160
  %1519 = vmatpush1.bf16.msra.mxu0 %v1159
  %1520 = vmatprep.subr.bf16.mxu0 %v1163
  %1521 = vmatpush1.bf16.msra.mxu0 %v1162
  %1522 = vmatprep.subr.bf16.mxu0 %v1166
  %1523 = vmatpush1.bf16.msra.mxu0 %v1165
  %1524 = vmatprep.subr.bf16.mxu0 %v1169
  %1525 = vmatpush1.bf16.msra.mxu0 %v1168
  %1526 = vmatprep.subr.bf16.mxu0 %v1172
  %1527 = vmatpush1.bf16.msra.mxu0 %v1171
  %1528 = vmatprep.subr.bf16.mxu0 %v1175
  %1529 = vmatpush1.bf16.msra.mxu0 %v1174
  %1530 = vmatprep.mubr.bf16.mxu0 %v336
  %1531 = vmatmul.mubr.bf16.gmra.mrb[0].mxu0 %v335
  %v1532 = vpop.f32.mrb[0].mxu0
  %v1533 = vadd.f32 %v1490, %v1532
  %v1534 = vpop.f32.mrb[0].mxu0
  %v1535 = vadd.f32 %v1492, %v1534
  %v1536 = vpop.f32.mrb[0].mxu0
  %v1537 = vadd.f32 %v1494, %v1536
  %v1538 = vpop.f32.mrb[0].mxu0
  %v1539 = vadd.f32 %v1496, %v1538
  %1540 = vdwg.mxu0
  %1541 = vmatprep.subr.bf16.mxu0 0
  %1542 = vmatpush1.bf16.msra.mxu0 %v987
  %1543 = vmatprep.subr.bf16.mxu0 0
  %1544 = vmatpush1.bf16.msra.mxu0 %v990
  %1545 = vmatprep.subr.bf16.mxu0 0
  %1546 = vmatpush1.bf16.msra.mxu0 %v993
  %1547 = vmatprep.subr.bf16.mxu0 0
  %1548 = vmatpush1.bf16.msra.mxu0 %v996
  %1549 = vmatprep.subr.bf16.mxu0 0
  %1550 = vmatpush1.bf16.msra.mxu0 %v999
  %1551 = vmatprep.subr.bf16.mxu0 0
  %1552 = vmatpush1.bf16.msra.mxu0 %v1002
  %1553 = vmatprep.subr.bf16.mxu0 0
  %1554 = vmatpush1.bf16.msra.mxu0 %v1005
  %1555 = vmatprep.subr.bf16.mxu0 0
  %1556 = vmatpush1.bf16.msra.mxu0 %v1008
  %1557 = vmatprep.subr.bf16.mxu0 0
  %1558 = vmatpush1.bf16.msra.mxu0 %v1011
  %1559 = vmatprep.subr.bf16.mxu0 0
  %1560 = vmatpush1.bf16.msra.mxu0 %v1014
  %1561 = vmatprep.subr.bf16.mxu0 0
  %1562 = vmatpush1.bf16.msra.mxu0 %v1017
  %1563 = vmatprep.subr.bf16.mxu0 0
  %1564 = vmatpush1.bf16.msra.mxu0 %v1020
  %1565 = vmatprep.subr.bf16.mxu0 0
  %1566 = vmatpush1.bf16.msra.mxu0 %v1023
  %1567 = vmatprep.subr.bf16.mxu0 0
  %1568 = vmatpush1.bf16.msra.mxu0 %v1026
  %1569 = vmatprep.subr.bf16.mxu0 0
  %1570 = vmatpush1.bf16.msra.mxu0 %v1029
  %1571 = vmatprep.subr.bf16.mxu0 0
  %1572 = vmatpush1.bf16.msra.mxu0 %v1032
  %1573 = vmatprep.mubr.bf16.mxu0 %v330
  %1574 = vmatmul.mubr.bf16.gmra.mrb[0].mxu0 %v329
  %v1575 = vpop.f32.mrb[0].mxu0
  %v1576 = vadd.f32 0.0, %v1575
  %v1577 = vpop.f32.mrb[0].mxu0
  %v1578 = vpop.f32.mrb[0].mxu0
  %v1579 = vadd.f32 0.0, %v1578
  %v1580 = vpop.f32.mrb[0].mxu0
  %1581 = vdwg.mxu0
  %1582 = vmatprep.subr.bf16.mxu0 0
  %1583 = vmatpush1.bf16.msra.mxu0 %v1035
  %1584 = vmatprep.subr.bf16.mxu0 0
  %1585 = vmatpush1.bf16.msra.mxu0 %v1038
  %1586 = vmatprep.subr.bf16.mxu0 0
  %1587 = vmatpush1.bf16.msra.mxu0 %v1041
  %1588 = vmatprep.subr.bf16.mxu0 0
  %1589 = vmatpush1.bf16.msra.mxu0 %v1044
  %1590 = vmatprep.subr.bf16.mxu0 0
  %1591 = vmatpush1.bf16.msra.mxu0 %v1047
  %1592 = vmatprep.subr.bf16.mxu0 0
  %1593 = vmatpush1.bf16.msra.mxu0 %v1050
  %1594 = vmatprep.subr.bf16.mxu0 0
  %1595 = vmatpush1.bf16.msra.mxu0 %v1053
  %1596 = vmatprep.subr.bf16.mxu0 0
  %1597 = vmatpush1.bf16.msra.mxu0 %v1056
  %1598 = vmatprep.subr.bf16.mxu0 0
  %1599 = vmatpush1.bf16.msra.mxu0 %v1059
  %1600 = vmatprep.subr.bf16.mxu0 0
  %1601 = vmatpush1.bf16.msra.mxu0 %v1062
  %1602 = vmatprep.subr.bf16.mxu0 0
  %1603 = vmatpush1.bf16.msra.mxu0 %v1065
  %1604 = vmatprep.subr.bf16.mxu0 0
  %1605 = vmatpush1.bf16.msra.mxu0 %v1068
  %1606 = vmatprep.subr.bf16.mxu0 0
  %1607 = vmatpush1.bf16.msra.mxu0 %v1071
  %1608 = vmatprep.subr.bf16.mxu0 0
  %1609 = vmatpush1.bf16.msra.mxu0 %v1074
  %1610 = vmatprep.subr.bf16.mxu0 0
  %1611 = vmatpush1.bf16.msra.mxu0 %v1077
  %1612 = vmatprep.subr.bf16.mxu0 0
  %1613 = vmatpush1.bf16.msra.mxu0 %v1080
  %1614 = vmatprep.mubr.bf16.mxu0 %v332
  %1615 = vmatmul.mubr.bf16.gmra.mrb[0].mxu0 %v331
  %v1616 = vpop.f32.mrb[0].mxu0
  %v1617 = vadd.f32 %v1576, %v1616
  %v1618 = vpop.f32.mrb[0].mxu0
  %v1619 = vpop.f32.mrb[0].mxu0
  %v1620 = vadd.f32 %v1579, %v1619
  %v1621 = vpop.f32.mrb[0].mxu0
  %1622 = vdwg.mxu0
  %1623 = vmatprep.subr.bf16.mxu0 0
  %1624 = vmatpush1.bf16.msra.mxu0 %v1083
  %1625 = vmatprep.subr.bf16.mxu0 0
  %1626 = vmatpush1.bf16.msra.mxu0 %v1086
  %1627 = vmatprep.subr.bf16.mxu0 0
  %1628 = vmatpush1.bf16.msra.mxu0 %v1089
  %1629 = vmatprep.subr.bf16.mxu0 0
  %1630 = vmatpush1.bf16.msra.mxu0 %v1092
  %1631 = vmatprep.subr.bf16.mxu0 0
  %1632 = vmatpush1.bf16.msra.mxu0 %v1095
  %1633 = vmatprep.subr.bf16.mxu0 0
  %1634 = vmatpush1.bf16.msra.mxu0 %v1098
  %1635 = vmatprep.subr.bf16.mxu0 0
  %1636 = vmatpush1.bf16.msra.mxu0 %v1101
  %1637 = vmatprep.subr.bf16.mxu0 0
  %1638 = vmatpush1.bf16.msra.mxu0 %v1104
  %1639 = vmatprep.subr.bf16.mxu0 0
  %1640 = vmatpush1.bf16.msra.mxu0 %v1107
  %1641 = vmatprep.subr.bf16.mxu0 0
  %1642 = vmatpush1.bf16.msra.mxu0 %v1110
  %1643 = vmatprep.subr.bf16.mxu0 0
  %1644 = vmatpush1.bf16.msra.mxu0 %v1113
  %1645 = vmatprep.subr.bf16.mxu0 0
  %1646 = vmatpush1.bf16.msra.mxu0 %v1116
  %1647 = vmatprep.subr.bf16.mxu0 0
  %1648 = vmatpush1.bf16.msra.mxu0 %v1119
  %1649 = vmatprep.subr.bf16.mxu0 0
  %1650 = vmatpush1.bf16.msra.mxu0 %v1122
  %1651 = vmatprep.subr.bf16.mxu0 0
  %1652 = vmatpush1.bf16.msra.mxu0 %v1125
  %1653 = vmatprep.subr.bf16.mxu0 0
  %1654 = vmatpush1.bf16.msra.mxu0 %v1128
  %1655 = vmatprep.mubr.bf16.mxu0 %v334
  %1656 = vmatmul.mubr.bf16.gmra.mrb[0].mxu0 %v333
  %v1657 = vpop.f32.mrb[0].mxu0
  %v1658 = vadd.f32 %v1617, %v1657
  %v1659 = vpop.f32.mrb[0].mxu0
  %v1660 = vpop.f32.mrb[0].mxu0
  %v1661 = vadd.f32 %v1620, %v1660
  %v1662 = vpop.f32.mrb[0].mxu0
  %1663 = vdwg.mxu0
  %1664 = vmatprep.subr.bf16.mxu0 0
  %1665 = vmatpush1.bf16.msra.mxu0 %v1131
  %1666 = vmatprep.subr.bf16.mxu0 0
  %1667 = vmatpush1.bf16.msra.mxu0 %v1134
  %1668 = vmatprep.subr.bf16.mxu0 0
  %1669 = vmatpush1.bf16.msra.mxu0 %v1137
  %1670 = vmatprep.subr.bf16.mxu0 0
  %1671 = vmatpush1.bf16.msra.mxu0 %v1140
  %1672 = vmatprep.subr.bf16.mxu0 0
  %1673 = vmatpush1.bf16.msra.mxu0 %v1143
  %1674 = vmatprep.subr.bf16.mxu0 0
  %1675 = vmatpush1.bf16.msra.mxu0 %v1146
  %1676 = vmatprep.subr.bf16.mxu0 0
  %1677 = vmatpush1.bf16.msra.mxu0 %v1149
  %1678 = vmatprep.subr.bf16.mxu0 0
  %1679 = vmatpush1.bf16.msra.mxu0 %v1152
  %1680 = vmatprep.subr.bf16.mxu0 0
  %1681 = vmatpush1.bf16.msra.mxu0 %v1155
  %1682 = vmatprep.subr.bf16.mxu0 0
  %1683 = vmatpush1.bf16.msra.mxu0 %v1158
  %1684 = vmatprep.subr.bf16.mxu0 0
  %1685 = vmatpush1.bf16.msra.mxu0 %v1161
  %1686 = vmatprep.subr.bf16.mxu0 0
  %1687 = vmatpush1.bf16.msra.mxu0 %v1164
  %1688 = vmatprep.subr.bf16.mxu0 0
  %1689 = vmatpush1.bf16.msra.mxu0 %v1167
  %1690 = vmatprep.subr.bf16.mxu0 0
  %1691 = vmatpush1.bf16.msra.mxu0 %v1170
  %1692 = vmatprep.subr.bf16.mxu0 0
  %1693 = vmatpush1.bf16.msra.mxu0 %v1173
  %1694 = vmatprep.subr.bf16.mxu0 0
  %1695 = vmatpush1.bf16.msra.mxu0 %v1176
  %1696 = vmatprep.mubr.bf16.mxu0 %v336
  %1697 = vmatmul.mubr.bf16.gmra.mrb[0].mxu0 %v335
  %v1698 = vpop.f32.mrb[0].mxu0
  %v1699 = vadd.f32 %v1658, %v1698
  %v1700 = vpop.f32.mrb[0].mxu0
  %v1701 = vpop.f32.mrb[0].mxu0
  %v1702 = vadd.f32 %v1661, %v1701
  %v1703 = vpop.f32.mrb[0].mxu0
  %1704 = vdwg.mxu0
  %v1705 = vadd.f32 %v35, %v1533
  %v1706 = vadd.f32 %v36, %v1535
  %v1707 = vadd.f32 %v37, %v1699
  %v1708 = vadd.f32 %v38, %v1537
  %v1709 = vadd.f32 %v39, %v1539
  %v1710 = vadd.f32 %v40, %v1702
  %1711 = vst [vmem:[#allocation2] sm:$0xff] %v1705
  %1712 = vst [vmem:[#allocation2 + $0x8] sm:$0xff] %v1706
  %vm1713 = vcmask 261120
  %1714 = vst.msk [vmem:[#allocation2 + $0x10] sm:$0xff] %vm1713, %v1707
  %1715 = vst [vmem:[#allocation2 + $0x18] sm:$0xff] %v1708
  %1716 = vst [vmem:[#allocation2 + $0x20] sm:$0xff] %v1709
  %1717 = vst.msk [vmem:[#allocation2 + $0x28] sm:$0xff] %vm1713, %v1710
  // Predicated region
  $region30: #{ensemble_forward.1} parent=0 // pred_check
    %p1718 = pneg %p24
  $region31: #{ensemble_forward.1} parent=0 // pred_check_branch
    %1720 = sbr.rel (%p1718) target = $region33
  $region32: #{ensemble_forward.1} parent=0 // pred_region
    %v1721 = vld [vmem:[#allocation2] sm:$0xff]
    %v1722 = vld [vmem:[#allocation2 + $0x8] sm:$0xff]
    %v1723 = vld [vmem:[#allocation2 + $0x10] sm:$0xff]
    %v1724 = vld [vmem:[#allocation2 + $0x18] sm:$0xff]
    %v1725 = vld [vmem:[#allocation2 + $0x20] sm:$0xff]
    %v1726 = vld [vmem:[#allocation2 + $0x28] sm:$0xff]
    %v1727 = vld [vmem:[%s2] sm:$0x7]
    %v1729 = vlaneseq
    %v1730 = vshrl.u32 %v1729, 7
    %v1731 = vsub.s32 0, %v1730
    %v1732 = vrot.slane %v1727, %v1731
    %v1733 = vlaneseq
    %v1734 = vshrl.u32 %v1733, 7
    %v1735 = vsub.s32 1, %v1734
    %v1736 = vrot.slane %v1727, %v1735
    %v1737 = vlaneseq
    %v1738 = vshrl.u32 %v1737, 7
    %v1739 = vsub.s32 2, %v1738
    %v1740 = vrot.slane %v1727, %v1739
    %v1744 = vadd.f32 %v1721, %v1732
    %v1745 = vadd.f32 %v1722, %v1736
    %v1746 = vadd.f32 %v1723, %v1740
    %v1747 = vadd.f32 %v1724, %v1732
    %v1748 = vadd.f32 %v1725, %v1736
    %v1749 = vadd.f32 %v1726, %v1740
    %v1750 = vmax.f32 %v1744, 0.0
    %v1751 = vmax.f32 %v1745, 0.0
    %v1752 = vmax.f32 %v1746, 0.0
    %v1753 = vmax.f32 %v1747, 0.0
    %v1754 = vmax.f32 %v1748, 0.0
    %v1755 = vmax.f32 %v1749, 0.0
    %v1756 = vpack.c.bf16 %v1753, %v1750
    %v1757 = vpack.c.bf16 %v1754, %v1751
    %v1758 = vpack.c.bf16 %v1755, %v1752
    %v1759 = vld [vmem:[%s3] sm:$0xf]
    %v1760 = vld [vmem:[%s3 + $0x4] sm:$0xf]
    %v1761 = vld [vmem:[%s3 + $0x8] sm:$0xf]
    %v1762 = vld [vmem:[%s3 + $0xc] sm:$0xf]
    %v1763 = vld [vmem:[%s3 + $0x10] sm:$0xf]
    %v1764 = vld [vmem:[%s3 + $0x14] sm:$0xf]
    %v1765 = vld [vmem:[%s3 + $0x18] sm:$0xf]
    %v1766 = vld [vmem:[%s3 + $0x1c] sm:$0xf]
    %v1767 = vld [vmem:[%s3 + $0x20] sm:$0xf]
    %v1768 = vld [vmem:[%s3 + $0x24] sm:$0xf]
    %v1769 = vld [vmem:[%s3 + $0x28] sm:$0xf]
    %v1770 = vld [vmem:[%s3 + $0x2c] sm:$0xf]
    %v1771 = vld [vmem:[%s3 + $0x30] sm:$0xf]
    %v1772 = vld [vmem:[%s3 + $0x34] sm:$0xf]
    %v1773 = vld [vmem:[%s3 + $0x38] sm:$0xf]
    %v1774 = vld [vmem:[%s3 + $0x3c] sm:$0xf]
    %v1775 = vld [vmem:[%s3 + $0x40] sm:$0xf]
    %v1776 = vld [vmem:[%s3 + $0x44] sm:$0xf]
    %v1777 = vld [vmem:[%s3 + $0x48] sm:$0xf]
    %v1778 = vld [vmem:[%s3 + $0x4c] sm:$0xf]
    %v1779 = vld [vmem:[%s3 + $0x50] sm:$0xf]
    %v1780 = vld [vmem:[%s3 + $0x54] sm:$0xf]
    %v1781 = vld [vmem:[%s3 + $0x58] sm:$0xf]
    %v1782 = vld [vmem:[%s3 + $0x5c] sm:$0xf]
    %v1783 = vld [vmem:[%s3 + $0x60] sm:$0xf]
    %v1784 = vld [vmem:[%s3 + $0x64] sm:$0xf]
    %v1785 = vld [vmem:[%s3 + $0x68] sm:$0xf]
    %v1786 = vld [vmem:[%s3 + $0x6c] sm:$0xf]
    %v1787 = vld [vmem:[%s3 + $0x70] sm:$0xf]
    %v1788 = vld [vmem:[%s3 + $0x74] sm:$0xf]
    %v1789 = vld [vmem:[%s3 + $0x78] sm:$0xf]
    %v1790 = vld [vmem:[%s3 + $0x7c] sm:$0xf]
    %v1791 = vld [vmem:[%s3 + $0x80] sm:$0xf]
    %v1792 = vld [vmem:[%s3 + $0x84] sm:$0xf]
    %v1793 = vld [vmem:[%s3 + $0x88] sm:$0xf]
    %v1794 = vld [vmem:[%s3 + $0x8c] sm:$0xf]
    %v1795 = vld [vmem:[%s4] sm:$0x1]
    %v1797 = vlaneseq
    %v1798 = vshrl.u32 %v1797, 7
    %v1799 = vsub.s32 0, %v1798
    %v1800 = vrot.slane %v1795, %v1799
    %v1838 = vunpack.c.l.b16 %v1759
    %v1839 = vunpack.c.l.b16 %v1760
    %v1840 = vunpack.c.l.b16 %v1761
    %v1841 = vunpack.c.l.b16 %v1762
    %v1842 = vunpack.c.l.b16 %v1763
    %v1843 = vunpack.c.l.b16 %v1764
    %v1844 = vunpack.c.l.b16 %v1765
    %v1845 = vunpack.c.l.b16 %v1766
    %v1846 = vunpack.c.l.b16 %v1767
    %v1847 = vunpack.c.l.b16 %v1768
    %v1848 = vunpack.c.l.b16 %v1769
    %v1849 = vunpack.c.l.b16 %v1770
    %v1850 = vunpack.c.l.b16 %v1771
    %v1851 = vunpack.c.l.b16 %v1772
    %v1852 = vunpack.c.l.b16 %v1773
    %v1853 = vunpack.c.l.b16 %v1774
    %v1854 = vunpack.c.l.b16 %v1775
    %v1855 = vunpack.c.l.b16 %v1776
    %v1856 = vunpack.c.l.b16 %v1777
    %v1857 = vunpack.c.l.b16 %v1778
    %v1858 = vunpack.c.l.b16 %v1779
    %v1859 = vunpack.c.l.b16 %v1780
    %v1860 = vunpack.c.l.b16 %v1781
    %v1861 = vunpack.c.l.b16 %v1782
    %v1862 = vunpack.c.l.b16 %v1783
    %v1863 = vunpack.c.l.b16 %v1784
    %v1864 = vunpack.c.l.b16 %v1785
    %v1865 = vunpack.c.l.b16 %v1786
    %v1866 = vunpack.c.l.b16 %v1787
    %v1867 = vunpack.c.l.b16 %v1788
    %v1868 = vunpack.c.l.b16 %v1789
    %v1869 = vunpack.c.l.b16 %v1790
    %v1870 = vunpack.c.l.b16 %v1791
    %v1871 = vunpack.c.l.b16 %v1792
    %v1872 = vunpack.c.l.b16 %v1793
    %v1873 = vunpack.c.l.b16 %v1794
    %v1874 = vpack.c.b16 %v1839, %v1838
    %v1875 = vpack.c.b16 %v1841, %v1840
    %v1876 = vpack.c.b16 %v1843, %v1842
    %v1877 = vpack.c.b16 %v1845, %v1844
    %v1878 = vpack.c.b16 %v1847, %v1846
    %v1879 = vpack.c.b16 %v1849, %v1848
    %v1880 = vpack.c.b16 %v1851, %v1850
    %v1881 = vpack.c.b16 %v1853, %v1852
    %v1882 = vpack.c.b16 %v1855, %v1854
    %v1883 = vpack.c.b16 %v1857, %v1856
    %v1884 = vpack.c.b16 %v1859, %v1858
    %v1885 = vpack.c.b16 %v1861, %v1860
    %v1886 = vpack.c.b16 %v1863, %v1862
    %v1887 = vpack.c.b16 %v1865, %v1864
    %v1888 = vpack.c.b16 %v1867, %v1866
    %v1889 = vpack.c.b16 %v1869, %v1868
    %v1890 = vpack.c.b16 %v1871, %v1870
    %v1891 = vpack.c.b16 %v1873, %v1872
    %v1911 = vsel %vm1713, %v1758, 0
    %1913 = vmatprep.subr.bf16.mxu0 0
    %1914 = vmatpush1.bf16.msra.mxu0 %v1874
    %1915 = vmatprep.subr.bf16.mxu0 0
    %1916 = vmatpush1.bf16.msra.mxu0 %v1875
    %1917 = vmatprep.subr.bf16.mxu0 0
    %1918 = vmatpush1.bf16.msra.mxu0 %v1876
    %1919 = vmatprep.subr.bf16.mxu0 0
    %1920 = vmatpush1.bf16.msra.mxu0 %v1877
    %1921 = vmatprep.subr.bf16.mxu0 0
    %1922 = vmatpush1.bf16.msra.mxu0 %v1878
    %1923 = vmatprep.subr.bf16.mxu0 0
    %1924 = vmatpush1.bf16.msra.mxu0 %v1879
    %1925 = vmatprep.subr.bf16.mxu0 0
    %1926 = vmatpush1.bf16.msra.mxu0 %v1880
    %1927 = vmatprep.subr.bf16.mxu0 0
    %1928 = vmatpush1.bf16.msra.mxu0 %v1881
    %1929 = vmatprep.subr.bf16.mxu0 0
    %1930 = vmatpush1.bf16.msra.mxu0 %v1882
    %1931 = vmatprep.subr.bf16.mxu0 0
    %1932 = vmatpush1.bf16.msra.mxu0 %v1883
    %1933 = vmatprep.subr.bf16.mxu0 0
    %1934 = vmatpush1.bf16.msra.mxu0 %v1884
    %1935 = vmatprep.subr.bf16.mxu0 0
    %1936 = vmatpush1.bf16.msra.mxu0 %v1885
    %1937 = vmatprep.subr.bf16.mxu0 0
    %1938 = vmatpush1.bf16.msra.mxu0 %v1886
    %1939 = vmatprep.subr.bf16.mxu0 0
    %1940 = vmatpush1.bf16.msra.mxu0 %v1887
    %1941 = vmatprep.subr.bf16.mxu0 0
    %1942 = vmatpush1.bf16.msra.mxu0 %v1888
    %1943 = vmatprep.subr.bf16.mxu0 0
    %1944 = vmatpush1.bf16.msra.mxu0 %v1889
    %1945 = vmatprep.mubr.bf16.mxu0 %v1757
    %1946 = vmatmul.mubr.bf16.gmra.mrb[0].mxu0 %v1756
    %v1947 = vpop.f32.mrb[0].mxu0
    %v1948 = vadd.f32 %v1800, %v1947
    %v1949 = vpop.f32.mrb[0].mxu0
    %v1950 = vpop.f32.mrb[0].mxu0
    %v1951 = vadd.f32 %v1800, %v1950
    %v1952 = vpop.f32.mrb[0].mxu0
    %1953 = vdwg.mxu0
    %1954 = vmatprep.subr.bf16.mxu0 0
    %1955 = vmatpush1.bf16.msra.mxu0 %v1890
    %1956 = vmatprep.subr.bf16.mxu0 0
    %1957 = vmatpush1.bf16.msra.mxu0 %v1891
    %1958 = vmatprep.subr.bf16.mxu0 0
    %1959 = vmatpush1.bf16.msra.mxu0 0
    %1960 = vmatprep.subr.bf16.mxu0 0
    %1961 = vmatpush1.bf16.msra.mxu0 0
    %1962 = vmatprep.subr.bf16.mxu0 0
    %1963 = vmatpush1.bf16.msra.mxu0 0
    %1964 = vmatprep.subr.bf16.mxu0 0
    %1965 = vmatpush1.bf16.msra.mxu0 0
    %1966 = vmatprep.subr.bf16.mxu0 0
    %1967 = vmatpush1.bf16.msra.mxu0 0
    %1968 = vmatprep.subr.bf16.mxu0 0
    %1969 = vmatpush1.bf16.msra.mxu0 0
    %1970 = vmatprep.subr.bf16.mxu0 0
    %1971 = vmatpush1.bf16.msra.mxu0 0
    %1972 = vmatprep.subr.bf16.mxu0 0
    %1973 = vmatpush1.bf16.msra.mxu0 0
    %1974 = vmatprep.subr.bf16.mxu0 0
    %1975 = vmatpush1.bf16.msra.mxu0 0
    %1976 = vmatprep.subr.bf16.mxu0 0
    %1977 = vmatpush1.bf16.msra.mxu0 0
    %1978 = vmatprep.subr.bf16.mxu0 0
    %1979 = vmatpush1.bf16.msra.mxu0 0
    %1980 = vmatprep.subr.bf16.mxu0 0
    %1981 = vmatpush1.bf16.msra.mxu0 0
    %1982 = vmatprep.subr.bf16.mxu0 0
    %1983 = vmatpush1.bf16.msra.mxu0 0
    %1984 = vmatprep.subr.bf16.mxu0 0
    %1985 = vmatpush1.bf16.msra.mxu0 0
    %1986 = vmatprep.mubr.bf16.mxu0 0
    %1987 = vmatmul.mubr.bf16.gmra.mrb[0].mxu0 %v1911
    %v1988 = vpop.f32.mrb[0].mxu0
    %v1989 = vadd.f32 %v1948, %v1988
    %v1990 = vpop.f32.mrb[0].mxu0
    %v1991 = vpop.f32.mrb[0].mxu0
    %v1992 = vadd.f32 %v1951, %v1991
    %v1993 = vpop.f32.mrb[0].mxu0
    %1994 = vdwg.mxu0
    %v1995 = vsub.f32 0.0, %v1989
    %v1996 = vsub.f32 0.0, %v1992
    %v1997 = vmul.f32 %v1995, 1.442695
    %v1998 = vpow.pop %v1997
    %v1999 = vmul.f32 %v1996, 1.442695
    %v2000 = vpow.pop %v1999
    %v2001 = vadd.f32 %v1998, 1.0
    %v2002 = vadd.f32 %v2000, 1.0
    %v2003 = vrcp.pop %v2001
    %v2004 = vmul.f32 1.0, %v2003
    %v2005 = vrcp.pop %v2002
    %v2006 = vmul.f32 1.0, %v2005
    %v2007 = vld [vmem:[%s5] sm:$0x1]
    %v2009 = vlaneseq
    %v2010 = vshrl.u32 %v2009, 7
    %v2011 = vsub.s32 0, %v2010
    %v2012 = vrot.slane %v2007, %v2011
    %v2014 = vmul.f32 %v2004, %v2012
    %v2015 = vmul.f32 %v2006, %v2012
    %2016 = vadd.xlane.f32.xlu0 %v2014
    %v2017 = vpop.xlane.xlu0 %2016
    %2018 = vadd.xlane.f32.xlu0 %v2015
    %v2019 = vpop.xlane.xlu0 %2018
    %2020 = vst [vmem:[%s6] sm:$0xff] %v2017
    %2021 = vst [vmem:[%s6 + $0x8] sm:$0xff] %v2019
  $region33: #{ensemble_forward.1} parent=0 // pred_fallthru
    _
  // Predicated region
  $region34: #{ensemble_forward.1} parent=0 // pred_check
    _
  $region35: #{ensemble_forward.1} parent=0 // pred_check_branch
    %2023 = sbr.rel (0) target = $region37
  $region36: #{ensemble_forward.1} parent=0 // pred_region
    _
  $region37: #{ensemble_forward.1} parent=0 // pred_fallthru
    _
  // Predicated region
  $region38: #{ensemble_forward.1} parent=0 // pred_check
    _
  $region39: #{ensemble_forward.1} parent=0 // pred_check_branch
    %2025 = sbr.rel (0) target = $region41
  $region40: #{ensemble_forward.1} parent=0 // pred_region
    _
  $region41: #{ensemble_forward.1} parent=0 // pred_fallthru
    _

</llo_original>
